<compile_context>
chip_gen: v6e
topology: v6e:2x2x1
jax: 0.10.0
libtpu: 0.0.40
codegen_flags: <defaults>
</compile_context>

<pallas_src>
import functools

import jax
import jax.numpy as jnp
from jax.experimental import pallas as pl
from jax.experimental.pallas import tpu as pltpu

PAD_IDX = 1933
LANE = 128


def _round_up(x, m):
    return (x + m - 1) // m * m


def ffn_kernel(tok_sm, text_ref, emb_ref, w1_ref, b1_ref, w2_ref, b2_ref,
               out_ref, stage_ref, *, seq_len, tile_b, emb_dim):
    """One batch tile: VMEM gather + vectorized masked mean + fc1/ReLU + fc2."""
    S, TB, E = seq_len, tile_b, emb_dim
    base = pl.program_id(0) * TB                       # first batch row of tile

    # ---- 1) gather: VMEM-resident table -> [S*TB, E] staging (no HBM DMAs) ----
    # Static (r, s) double loop; only the source row index `tok` is dynamic.
    # Row (r, s) lands at sublane s*TB + r so the reduce below reads contiguous,
    # (8,128)-aligned [TB, E] slabs per position s.
    # TODO(synk): switch the outer loop to lax.fori_loop(unroll=True) when TB*S
    # is large at production shapes (code-size), keeping the inner s loop static.
    for r in range(TB):
        row_base = (base + r) * S                      # flat SMEM offset, no div/mod
        for s in range(S):
            tok = tok_sm[row_base + s]
            stage_ref[pl.ds(s * TB + r, 1), :] = emb_ref[pl.ds(tok, 1), :]

    # ---- 2) masked mean: one vectorized reduce over the whole tile ------------
    mask = (text_ref[...] != PAD_IDX).astype(jnp.float32)             # [TB, S]
    cnt = jnp.maximum(jnp.sum(mask, axis=1, keepdims=True), 1.0)      # [TB, 1]
    staged = stage_ref[...]                                           # [S*TB, E]
    summed = jnp.zeros((TB, E), jnp.float32)
    for s in range(S):                                 # S full-vreg VPU FMAs
        summed = summed + staged[s * TB:(s + 1) * TB, :] * mask[:, s:s + 1]
    avg = summed / cnt                                                # [TB, E]

    # ---- 3) MLP: fc1 + ReLU + fc2, lane-dense padded outputs ------------------
    h = jnp.dot(avg, w1_ref[...], preferred_element_type=jnp.float32) + b1_ref[...]
    h = jnp.maximum(h, 0.0)                                           # [TB, Hp]
    logits = jnp.dot(h, w2_ref[...], preferred_element_type=jnp.float32) + b2_ref[...]
    out_ref[...] = logits                                             # [TB, Cp]


@jax.jit
def ff_network_forward(text, emb_table, w1, b1, w2, b2):
    """FFNetwork forward: gather + masked mean + MLP in one Pallas kernel; the
    batch-axis softmax runs on the tiny [B, C] logits in JAX glue."""
    B, S = text.shape
    V, E = emb_table.shape
    H = w1.shape[1]
    C = w2.shape[1]

    # Batch rows per grid step: cap at 128 (fills the MXU M dim on v5e; good
    # default for v6e/v7x too).  Toy B=2 -> TB=8.  For v7x, also keep the
    # staging + weights tile under the 64 MiB-per-TC VMEM budget.
    TB = min(128, _round_up(B, 8))
    B_pad = _round_up(B, TB)
    H_pad = _round_up(H, LANE)
    C_pad = _round_up(C, LANE)

    # --- glue: pad batch with PAD rows; flatten token ids for 1-D SMEM ---------
    text_p = jnp.full((B_pad, S), PAD_IDX, jnp.int32).at[:B, :].set(
        text.astype(jnp.int32))
    tok_flat = text_p.reshape(-1)                                  # [B_pad*S] int32

    # --- parameter prep (in production: once, outside the step; bf16 optional) -
    emb_f32 = emb_table.astype(jnp.float32)
    w1_p = jnp.zeros((E, H_pad), jnp.float32).at[:, :H].set(w1)
    b1_p = jnp.zeros((1, H_pad), jnp.float32).at[:, :H].set(b1)
    w2_p = jnp.zeros((H_pad, C_pad), jnp.float32).at[:H, :C].set(w2)
    b2_p = jnp.zeros((1, C_pad), jnp.float32).at[:, :C].set(b2)

    cost = pl.CostEstimate(
        flops=2 * B_pad * (E * H_pad + H_pad * C_pad),
        transcendentals=0,
        bytes_accessed=(V * E + E * H_pad + H_pad * C_pad + H_pad + C_pad) * 4
                       + B_pad * S * 8 + B_pad * C_pad * 4,
    )

    kernel = functools.partial(ffn_kernel, seq_len=S, tile_b=TB, emb_dim=E)

    logits_pad = pl.pallas_call(
        kernel,
        out_shape=jax.ShapeDtypeStruct((B_pad, C_pad), jnp.float32),
        grid_spec=pltpu.PrefetchScalarGridSpec(
            num_scalar_prefetch=1,                     # flat token ids -> SMEM
            grid=(B_pad // TB,),
            in_specs=[
                pl.BlockSpec((TB, S), lambda i, *_: (i, 0)),          # text (mask)
                pl.BlockSpec((V, E), lambda i, *_: (0, 0)),           # emb table (VMEM-resident)
                pl.BlockSpec((E, H_pad), lambda i, *_: (0, 0)),       # w1 (resident)
                pl.BlockSpec((1, H_pad), lambda i, *_: (0, 0)),       # b1
                pl.BlockSpec((H_pad, C_pad), lambda i, *_: (0, 0)),   # w2 (resident)
                pl.BlockSpec((1, C_pad), lambda i, *_: (0, 0)),       # b2
            ],
            out_specs=pl.BlockSpec((TB, C_pad), lambda i, *_: (i, 0)),  # lane-dense
            scratch_shapes=[
                pltpu.VMEM((S * TB, E), jnp.float32),  # gather staging buffer
            ],
        ),
        compiler_params=pltpu.CompilerParams(
            dimension_semantics=("parallel",),         # shard batch tiles on v7x 2-TC
        ),
        cost_estimate=cost,
    )(tok_flat, text_p, emb_f32, w1_p, b1_p, w2_p, b2_p)

    logits = logits_pad[:B, :C]
    # softmax over dim=0 (the batch axis), exactly as the PyTorch module writes it.
    return jax.nn.softmax(logits, axis=0)


def reference_forward(text, emb_table, w1, b1, w2, b2):
    """Pure-JAX f32 reference (mirrors the PyTorch module, with the div-0 guard)."""
    emb = jnp.take(emb_table, text, axis=0)
    mask = (text != PAD_IDX).astype(jnp.float32)
    summed = jnp.sum(emb * mask[:, :, None], axis=1)
    counts = jnp.maximum(jnp.sum(mask, axis=1, keepdims=True), 1.0)
    avg = summed / counts
    h = jnp.maximum(avg @ w1 + b1, 0.0)
    logits = h @ w2 + b2
    return jax.nn.softmax(logits, axis=0)


def init_params(key, vocab_size, embedding_size, hidden_size, num_classes):
    """Deterministic parameter init mirroring PyTorch defaults (stored [in, out])."""
    k_emb, k_w1, k_b1, k_w2, k_b2 = jax.random.split(key, 5)

    emb_table = jax.random.normal(k_emb, (vocab_size, embedding_size), jnp.float32)
    emb_table = emb_table.at[PAD_IDX].set(0.0)          # nn.Embedding padding row

    bound1 = 1.0 / (embedding_size ** 0.5)
    w1 = jax.random.uniform(k_w1, (embedding_size, hidden_size), jnp.float32,
                            -bound1, bound1)
    b1 = jax.random.uniform(k_b1, (1, hidden_size), jnp.float32, -bound1, bound1)

    bound2 = 1.0 / (hidden_size ** 0.5)
    w2 = jax.random.uniform(k_w2, (hidden_size, num_classes), jnp.float32,
                            -bound2, bound2)
    b2 = jax.random.uniform(k_b2, (1, num_classes), jnp.float32, -bound2, bound2)

    return emb_table, w1, b1, w2, b2


if __name__ == "__main__":
    vocab_size, embedding_size, hidden_size, num_classes = 2048, 32, 32, 4
    B, S = 2, 8

    key = jax.random.PRNGKey(0)
    k_params, k_text = jax.random.split(key)

    emb_table, w1, b1, w2, b2 = init_params(
        k_params, vocab_size, embedding_size, hidden_size, num_classes)

    # Token ids with explicit padding positions (each row keeps non-pad tokens).
    text = jax.random.randint(k_text, (B, S), 0, vocab_size, dtype=jnp.int32)
    text = text.at[0, 6:].set(PAD_IDX)   # row 0: last 2 positions padded
    text = text.at[1, 5:].set(PAD_IDX)   # row 1: last 3 positions padded

    out = ff_network_forward(text, emb_table, w1, b1, w2, b2)
    out = jax.block_until_ready(out)

    ref = reference_forward(text, emb_table, w1, b1, w2, b2)

    assert out.shape == (B, num_classes)
    # softmax over dim=0 -> each class column sums to 1.
    assert jnp.allclose(jnp.sum(out, axis=0), jnp.ones((num_classes,)), atol=1e-5)
    # f32 end-to-end: tight tolerance vs the f32 reference.
    assert jnp.allclose(out, ref, atol=2e-3, rtol=2e-3)

    print("KERNEL_OK")
</pallas_src>

<mosaic_0001>
module attributes {stable_mosaic.version = 11 : i64} {
  func.func @ffn_kernel(%arg0: i32, %arg1: memref<64xi32, #tpu.memory_space<smem>>, %arg2: memref<8x8xi32, #tpu.memory_space<vmem>>, %arg3: memref<2048x32xf32, #tpu.memory_space<vmem>>, %arg4: memref<32x128xf32, #tpu.memory_space<vmem>>, %arg5: memref<1x128xf32, #tpu.memory_space<vmem>>, %arg6: memref<128x128xf32, #tpu.memory_space<vmem>>, %arg7: memref<1x128xf32, #tpu.memory_space<vmem>>, %arg8: memref<8x128xf32, #tpu.memory_space<vmem>>, %arg9: memref<64x32xf32, #tpu.memory_space<vmem>>) attributes {dimension_semantics = [#tpu.dimension_semantics<parallel>], iteration_bounds = array<i64: 1>, scalar_prefetch = 1 : i64, scratch_operands = 1 : i64, tpu.core_type = #tpu.core_type<tc>, window_params = [{transform_indices = @transform_0, window_bounds = array<i64: 8, 8>}, {pipeline_mode = #tpu.pipeline_mode<synchronous>, transform_indices = @transform_1, window_bounds = array<i64: 2048, 32>}, {pipeline_mode = #tpu.pipeline_mode<synchronous>, transform_indices = @transform_2, window_bounds = array<i64: 32, 128>}, {pipeline_mode = #tpu.pipeline_mode<synchronous>, transform_indices = @transform_3, window_bounds = array<i64: 1, 128>}, {pipeline_mode = #tpu.pipeline_mode<synchronous>, transform_indices = @transform_4, window_bounds = array<i64: 128, 128>}, {pipeline_mode = #tpu.pipeline_mode<synchronous>, transform_indices = @transform_5, window_bounds = array<i64: 1, 128>}, {transform_indices = @transform_6, window_bounds = array<i64: 8, 128>}]} {
    %c8_i32 = arith.constant 8 : i32
    %0 = arith.muli %arg0, %c8_i32 : i32
    %c0_i32 = arith.constant 0 : i32
    %1 = arith.addi %0, %c0_i32 : i32
    %c8_i32_0 = arith.constant 8 : i32
    %2 = arith.muli %1, %c8_i32_0 : i32
    %c0_i32_1 = arith.constant 0 : i32
    %3 = arith.addi %2, %c0_i32_1 : i32
    %4 = arith.index_cast %3 : i32 to index
    %5 = memref.load %arg1[%4] : memref<64xi32, #tpu.memory_space<smem>>
    %6 = arith.index_cast %5 : i32 to index
    %c0 = arith.constant 0 : index
    %7 = vector.load %arg3[%6, %c0] : memref<2048x32xf32, #tpu.memory_space<vmem>>, vector<1x32xf32>
    %c0_2 = arith.constant 0 : index
    %c0_3 = arith.constant 0 : index
    %8 = vector.load %arg9[%c0_2, %c0_3] : memref<64x32xf32, #tpu.memory_space<vmem>>, vector<1x32xf32>
    tpu.vector_store %arg9[%c0_2, %c0_3], %7 {strides = array<i32>} : memref<64x32xf32, #tpu.memory_space<vmem>>, vector<1x32xf32>,
    %c1_i32 = arith.constant 1 : i32
    %9 = arith.addi %2, %c1_i32 : i32
    %10 = arith.index_cast %9 : i32 to index
    %11 = memref.load %arg1[%10] : memref<64xi32, #tpu.memory_space<smem>>
    %12 = arith.index_cast %11 : i32 to index
    %c0_4 = arith.constant 0 : index
    %13 = vector.load %arg3[%12, %c0_4] : memref<2048x32xf32, #tpu.memory_space<vmem>>, vector<1x32xf32>
    %c8 = arith.constant 8 : index
    %c0_5 = arith.constant 0 : index
    %14 = vector.load %arg9[%c8, %c0_5] : memref<64x32xf32, #tpu.memory_space<vmem>>, vector<1x32xf32>
    tpu.vector_store %arg9[%c8, %c0_5], %13 {strides = array<i32>} : memref<64x32xf32, #tpu.memory_space<vmem>>, vector<1x32xf32>,
    %c2_i32 = arith.constant 2 : i32
    %15 = arith.addi %2, %c2_i32 : i32
    %16 = arith.index_cast %15 : i32 to index
    %17 = memref.load %arg1[%16] : memref<64xi32, #tpu.memory_space<smem>>
    %18 = arith.index_cast %17 : i32 to index
    %c0_6 = arith.constant 0 : index
    %19 = vector.load %arg3[%18, %c0_6] : memref<2048x32xf32, #tpu.memory_space<vmem>>, vector<1x32xf32>
    %c16 = arith.constant 16 : index
    %c0_7 = arith.constant 0 : index
    %20 = vector.load %arg9[%c16, %c0_7] : memref<64x32xf32, #tpu.memory_space<vmem>>, vector<1x32xf32>
    tpu.vector_store %arg9[%c16, %c0_7], %19 {strides = array<i32>} : memref<64x32xf32, #tpu.memory_space<vmem>>, vector<1x32xf32>,
    %c3_i32 = arith.constant 3 : i32
    %21 = arith.addi %2, %c3_i32 : i32
    %22 = arith.index_cast %21 : i32 to index
    %23 = memref.load %arg1[%22] : memref<64xi32, #tpu.memory_space<smem>>
    %24 = arith.index_cast %23 : i32 to index
    %c0_8 = arith.constant 0 : index
    %25 = vector.load %arg3[%24, %c0_8] : memref<2048x32xf32, #tpu.memory_space<vmem>>, vector<1x32xf32>
    %c24 = arith.constant 24 : index
    %c0_9 = arith.constant 0 : index
    %26 = vector.load %arg9[%c24, %c0_9] : memref<64x32xf32, #tpu.memory_space<vmem>>, vector<1x32xf32>
    tpu.vector_store %arg9[%c24, %c0_9], %25 {strides = array<i32>} : memref<64x32xf32, #tpu.memory_space<vmem>>, vector<1x32xf32>,
    %c4_i32 = arith.constant 4 : i32
    %27 = arith.addi %2, %c4_i32 : i32
    %28 = arith.index_cast %27 : i32 to index
    %29 = memref.load %arg1[%28] : memref<64xi32, #tpu.memory_space<smem>>
    %30 = arith.index_cast %29 : i32 to index
    %c0_10 = arith.constant 0 : index
    %31 = vector.load %arg3[%30, %c0_10] : memref<2048x32xf32, #tpu.memory_space<vmem>>, vector<1x32xf32>
    %c32 = arith.constant 32 : index
    %c0_11 = arith.constant 0 : index
    %32 = vector.load %arg9[%c32, %c0_11] : memref<64x32xf32, #tpu.memory_space<vmem>>, vector<1x32xf32>
    tpu.vector_store %arg9[%c32, %c0_11], %31 {strides = array<i32>} : memref<64x32xf32, #tpu.memory_space<vmem>>, vector<1x32xf32>,
    %c5_i32 = arith.constant 5 : i32
    %33 = arith.addi %2, %c5_i32 : i32
    %34 = arith.index_cast %33 : i32 to index
    %35 = memref.load %arg1[%34] : memref<64xi32, #tpu.memory_space<smem>>
    %36 = arith.index_cast %35 : i32 to index
    %c0_12 = arith.constant 0 : index
    %37 = vector.load %arg3[%36, %c0_12] : memref<2048x32xf32, #tpu.memory_space<vmem>>, vector<1x32xf32>
    %c40 = arith.constant 40 : index
    %c0_13 = arith.constant 0 : index
    %38 = vector.load %arg9[%c40, %c0_13] : memref<64x32xf32, #tpu.memory_space<vmem>>, vector<1x32xf32>
    tpu.vector_store %arg9[%c40, %c0_13], %37 {strides = array<i32>} : memref<64x32xf32, #tpu.memory_space<vmem>>, vector<1x32xf32>,
    %c6_i32 = arith.constant 6 : i32
    %39 = arith.addi %2, %c6_i32 : i32
    %40 = arith.index_cast %39 : i32 to index
    %41 = memref.load %arg1[%40] : memref<64xi32, #tpu.memory_space<smem>>
    %42 = arith.index_cast %41 : i32 to index
    %c0_14 = arith.constant 0 : index
    %43 = vector.load %arg3[%42, %c0_14] : memref<2048x32xf32, #tpu.memory_space<vmem>>, vector<1x32xf32>
    %c48 = arith.constant 48 : index
    %c0_15 = arith.constant 0 : index
    %44 = vector.load %arg9[%c48, %c0_15] : memref<64x32xf32, #tpu.memory_space<vmem>>, vector<1x32xf32>
    tpu.vector_store %arg9[%c48, %c0_15], %43 {strides = array<i32>} : memref<64x32xf32, #tpu.memory_space<vmem>>, vector<1x32xf32>,
    %c7_i32 = arith.constant 7 : i32
    %45 = arith.addi %2, %c7_i32 : i32
    %46 = arith.index_cast %45 : i32 to index
    %47 = memref.load %arg1[%46] : memref<64xi32, #tpu.memory_space<smem>>
    %48 = arith.index_cast %47 : i32 to index
    %c0_16 = arith.constant 0 : index
    %49 = vector.load %arg3[%48, %c0_16] : memref<2048x32xf32, #tpu.memory_space<vmem>>, vector<1x32xf32>
    %c56 = arith.constant 56 : index
    %c0_17 = arith.constant 0 : index
    %50 = vector.load %arg9[%c56, %c0_17] : memref<64x32xf32, #tpu.memory_space<vmem>>, vector<1x32xf32>
    tpu.vector_store %arg9[%c56, %c0_17], %49 {strides = array<i32>} : memref<64x32xf32, #tpu.memory_space<vmem>>, vector<1x32xf32>,
    %c1_i32_18 = arith.constant 1 : i32
    %51 = arith.addi %0, %c1_i32_18 : i32
    %c8_i32_19 = arith.constant 8 : i32
    %52 = arith.muli %51, %c8_i32_19 : i32
    %c0_i32_20 = arith.constant 0 : i32
    %53 = arith.addi %52, %c0_i32_20 : i32
    %54 = arith.index_cast %53 : i32 to index
    %55 = memref.load %arg1[%54] : memref<64xi32, #tpu.memory_space<smem>>
    %56 = arith.index_cast %55 : i32 to index
    %c0_21 = arith.constant 0 : index
    %57 = vector.load %arg3[%56, %c0_21] : memref<2048x32xf32, #tpu.memory_space<vmem>>, vector<1x32xf32>
    %c1 = arith.constant 1 : index
    %c0_22 = arith.constant 0 : index
    %58 = vector.load %arg9[%c1, %c0_22] : memref<64x32xf32, #tpu.memory_space<vmem>>, vector<1x32xf32>
    tpu.vector_store %arg9[%c1, %c0_22], %57 {strides = array<i32>} : memref<64x32xf32, #tpu.memory_space<vmem>>, vector<1x32xf32>,
    %c1_i32_23 = arith.constant 1 : i32
    %59 = arith.addi %52, %c1_i32_23 : i32
    %60 = arith.index_cast %59 : i32 to index
    %61 = memref.load %arg1[%60] : memref<64xi32, #tpu.memory_space<smem>>
    %62 = arith.index_cast %61 : i32 to index
    %c0_24 = arith.constant 0 : index
    %63 = vector.load %arg3[%62, %c0_24] : memref<2048x32xf32, #tpu.memory_space<vmem>>, vector<1x32xf32>
    %c9 = arith.constant 9 : index
    %c0_25 = arith.constant 0 : index
    %64 = vector.load %arg9[%c9, %c0_25] : memref<64x32xf32, #tpu.memory_space<vmem>>, vector<1x32xf32>
    tpu.vector_store %arg9[%c9, %c0_25], %63 {strides = array<i32>} : memref<64x32xf32, #tpu.memory_space<vmem>>, vector<1x32xf32>,
    %c2_i32_26 = arith.constant 2 : i32
    %65 = arith.addi %52, %c2_i32_26 : i32
    %66 = arith.index_cast %65 : i32 to index
    %67 = memref.load %arg1[%66] : memref<64xi32, #tpu.memory_space<smem>>
    %68 = arith.index_cast %67 : i32 to index
    %c0_27 = arith.constant 0 : index
    %69 = vector.load %arg3[%68, %c0_27] : memref<2048x32xf32, #tpu.memory_space<vmem>>, vector<1x32xf32>
    %c17 = arith.constant 17 : index
    %c0_28 = arith.constant 0 : index
    %70 = vector.load %arg9[%c17, %c0_28] : memref<64x32xf32, #tpu.memory_space<vmem>>, vector<1x32xf32>
    tpu.vector_store %arg9[%c17, %c0_28], %69 {strides = array<i32>} : memref<64x32xf32, #tpu.memory_space<vmem>>, vector<1x32xf32>,
    %c3_i32_29 = arith.constant 3 : i32
    %71 = arith.addi %52, %c3_i32_29 : i32
    %72 = arith.index_cast %71 : i32 to index
    %73 = memref.load %arg1[%72] : memref<64xi32, #tpu.memory_space<smem>>
    %74 = arith.index_cast %73 : i32 to index
    %c0_30 = arith.constant 0 : index
    %75 = vector.load %arg3[%74, %c0_30] : memref<2048x32xf32, #tpu.memory_space<vmem>>, vector<1x32xf32>
    %c25 = arith.constant 25 : index
    %c0_31 = arith.constant 0 : index
    %76 = vector.load %arg9[%c25, %c0_31] : memref<64x32xf32, #tpu.memory_space<vmem>>, vector<1x32xf32>
    tpu.vector_store %arg9[%c25, %c0_31], %75 {strides = array<i32>} : memref<64x32xf32, #tpu.memory_space<vmem>>, vector<1x32xf32>,
    %c4_i32_32 = arith.constant 4 : i32
    %77 = arith.addi %52, %c4_i32_32 : i32
    %78 = arith.index_cast %77 : i32 to index
    %79 = memref.load %arg1[%78] : memref<64xi32, #tpu.memory_space<smem>>
    %80 = arith.index_cast %79 : i32 to index
    %c0_33 = arith.constant 0 : index
    %81 = vector.load %arg3[%80, %c0_33] : memref<2048x32xf32, #tpu.memory_space<vmem>>, vector<1x32xf32>
    %c33 = arith.constant 33 : index
    %c0_34 = arith.constant 0 : index
    %82 = vector.load %arg9[%c33, %c0_34] : memref<64x32xf32, #tpu.memory_space<vmem>>, vector<1x32xf32>
    tpu.vector_store %arg9[%c33, %c0_34], %81 {strides = array<i32>} : memref<64x32xf32, #tpu.memory_space<vmem>>, vector<1x32xf32>,
    %c5_i32_35 = arith.constant 5 : i32
    %83 = arith.addi %52, %c5_i32_35 : i32
    %84 = arith.index_cast %83 : i32 to index
    %85 = memref.load %arg1[%84] : memref<64xi32, #tpu.memory_space<smem>>
    %86 = arith.index_cast %85 : i32 to index
    %c0_36 = arith.constant 0 : index
    %87 = vector.load %arg3[%86, %c0_36] : memref<2048x32xf32, #tpu.memory_space<vmem>>, vector<1x32xf32>
    %c41 = arith.constant 41 : index
    %c0_37 = arith.constant 0 : index
    %88 = vector.load %arg9[%c41, %c0_37] : memref<64x32xf32, #tpu.memory_space<vmem>>, vector<1x32xf32>
    tpu.vector_store %arg9[%c41, %c0_37], %87 {strides = array<i32>} : memref<64x32xf32, #tpu.memory_space<vmem>>, vector<1x32xf32>,
    %c6_i32_38 = arith.constant 6 : i32
    %89 = arith.addi %52, %c6_i32_38 : i32
    %90 = arith.index_cast %89 : i32 to index
    %91 = memref.load %arg1[%90] : memref<64xi32, #tpu.memory_space<smem>>
    %92 = arith.index_cast %91 : i32 to index
    %c0_39 = arith.constant 0 : index
    %93 = vector.load %arg3[%92, %c0_39] : memref<2048x32xf32, #tpu.memory_space<vmem>>, vector<1x32xf32>
    %c49 = arith.constant 49 : index
    %c0_40 = arith.constant 0 : index
    %94 = vector.load %arg9[%c49, %c0_40] : memref<64x32xf32, #tpu.memory_space<vmem>>, vector<1x32xf32>
    tpu.vector_store %arg9[%c49, %c0_40], %93 {strides = array<i32>} : memref<64x32xf32, #tpu.memory_space<vmem>>, vector<1x32xf32>,
    %c7_i32_41 = arith.constant 7 : i32
    %95 = arith.addi %52, %c7_i32_41 : i32
    %96 = arith.index_cast %95 : i32 to index
    %97 = memref.load %arg1[%96] : memref<64xi32, #tpu.memory_space<smem>>
    %98 = arith.index_cast %97 : i32 to index
    %c0_42 = arith.constant 0 : index
    %99 = vector.load %arg3[%98, %c0_42] : memref<2048x32xf32, #tpu.memory_space<vmem>>, vector<1x32xf32>
    %c57 = arith.constant 57 : index
    %c0_43 = arith.constant 0 : index
    %100 = vector.load %arg9[%c57, %c0_43] : memref<64x32xf32, #tpu.memory_space<vmem>>, vector<1x32xf32>
    tpu.vector_store %arg9[%c57, %c0_43], %99 {strides = array<i32>} : memref<64x32xf32, #tpu.memory_space<vmem>>, vector<1x32xf32>,
    %c2_i32_44 = arith.constant 2 : i32
    %101 = arith.addi %0, %c2_i32_44 : i32
    %c8_i32_45 = arith.constant 8 : i32
    %102 = arith.muli %101, %c8_i32_45 : i32
    %c0_i32_46 = arith.constant 0 : i32
    %103 = arith.addi %102, %c0_i32_46 : i32
    %104 = arith.index_cast %103 : i32 to index
    %105 = memref.load %arg1[%104] : memref<64xi32, #tpu.memory_space<smem>>
    %106 = arith.index_cast %105 : i32 to index
    %c0_47 = arith.constant 0 : index
    %107 = vector.load %arg3[%106, %c0_47] : memref<2048x32xf32, #tpu.memory_space<vmem>>, vector<1x32xf32>
    %c2 = arith.constant 2 : index
    %c0_48 = arith.constant 0 : index
    %108 = vector.load %arg9[%c2, %c0_48] : memref<64x32xf32, #tpu.memory_space<vmem>>, vector<1x32xf32>
    tpu.vector_store %arg9[%c2, %c0_48], %107 {strides = array<i32>} : memref<64x32xf32, #tpu.memory_space<vmem>>, vector<1x32xf32>,
    %c1_i32_49 = arith.constant 1 : i32
    %109 = arith.addi %102, %c1_i32_49 : i32
    %110 = arith.index_cast %109 : i32 to index
    %111 = memref.load %arg1[%110] : memref<64xi32, #tpu.memory_space<smem>>
    %112 = arith.index_cast %111 : i32 to index
    %c0_50 = arith.constant 0 : index
    %113 = vector.load %arg3[%112, %c0_50] : memref<2048x32xf32, #tpu.memory_space<vmem>>, vector<1x32xf32>
    %c10 = arith.constant 10 : index
    %c0_51 = arith.constant 0 : index
    %114 = vector.load %arg9[%c10, %c0_51] : memref<64x32xf32, #tpu.memory_space<vmem>>, vector<1x32xf32>
    tpu.vector_store %arg9[%c10, %c0_51], %113 {strides = array<i32>} : memref<64x32xf32, #tpu.memory_space<vmem>>, vector<1x32xf32>,
    %c2_i32_52 = arith.constant 2 : i32
    %115 = arith.addi %102, %c2_i32_52 : i32
    %116 = arith.index_cast %115 : i32 to index
    %117 = memref.load %arg1[%116] : memref<64xi32, #tpu.memory_space<smem>>
    %118 = arith.index_cast %117 : i32 to index
    %c0_53 = arith.constant 0 : index
    %119 = vector.load %arg3[%118, %c0_53] : memref<2048x32xf32, #tpu.memory_space<vmem>>, vector<1x32xf32>
    %c18 = arith.constant 18 : index
    %c0_54 = arith.constant 0 : index
    %120 = vector.load %arg9[%c18, %c0_54] : memref<64x32xf32, #tpu.memory_space<vmem>>, vector<1x32xf32>
    tpu.vector_store %arg9[%c18, %c0_54], %119 {strides = array<i32>} : memref<64x32xf32, #tpu.memory_space<vmem>>, vector<1x32xf32>,
    %c3_i32_55 = arith.constant 3 : i32
    %121 = arith.addi %102, %c3_i32_55 : i32
    %122 = arith.index_cast %121 : i32 to index
    %123 = memref.load %arg1[%122] : memref<64xi32, #tpu.memory_space<smem>>
    %124 = arith.index_cast %123 : i32 to index
    %c0_56 = arith.constant 0 : index
    %125 = vector.load %arg3[%124, %c0_56] : memref<2048x32xf32, #tpu.memory_space<vmem>>, vector<1x32xf32>
    %c26 = arith.constant 26 : index
    %c0_57 = arith.constant 0 : index
    %126 = vector.load %arg9[%c26, %c0_57] : memref<64x32xf32, #tpu.memory_space<vmem>>, vector<1x32xf32>
    tpu.vector_store %arg9[%c26, %c0_57], %125 {strides = array<i32>} : memref<64x32xf32, #tpu.memory_space<vmem>>, vector<1x32xf32>,
    %c4_i32_58 = arith.constant 4 : i32
    %127 = arith.addi %102, %c4_i32_58 : i32
    %128 = arith.index_cast %127 : i32 to index
    %129 = memref.load %arg1[%128] : memref<64xi32, #tpu.memory_space<smem>>
    %130 = arith.index_cast %129 : i32 to index
    %c0_59 = arith.constant 0 : index
    %131 = vector.load %arg3[%130, %c0_59] : memref<2048x32xf32, #tpu.memory_space<vmem>>, vector<1x32xf32>
    %c34 = arith.constant 34 : index
    %c0_60 = arith.constant 0 : index
    %132 = vector.load %arg9[%c34, %c0_60] : memref<64x32xf32, #tpu.memory_space<vmem>>, vector<1x32xf32>
    tpu.vector_store %arg9[%c34, %c0_60], %131 {strides = array<i32>} : memref<64x32xf32, #tpu.memory_space<vmem>>, vector<1x32xf32>,
    %c5_i32_61 = arith.constant 5 : i32
    %133 = arith.addi %102, %c5_i32_61 : i32
    %134 = arith.index_cast %133 : i32 to index
    %135 = memref.load %arg1[%134] : memref<64xi32, #tpu.memory_space<smem>>
    %136 = arith.index_cast %135 : i32 to index
    %c0_62 = arith.constant 0 : index
    %137 = vector.load %arg3[%136, %c0_62] : memref<2048x32xf32, #tpu.memory_space<vmem>>, vector<1x32xf32>
    %c42 = arith.constant 42 : index
    %c0_63 = arith.constant 0 : index
    %138 = vector.load %arg9[%c42, %c0_63] : memref<64x32xf32, #tpu.memory_space<vmem>>, vector<1x32xf32>
    tpu.vector_store %arg9[%c42, %c0_63], %137 {strides = array<i32>} : memref<64x32xf32, #tpu.memory_space<vmem>>, vector<1x32xf32>,
    %c6_i32_64 = arith.constant 6 : i32
    %139 = arith.addi %102, %c6_i32_64 : i32
    %140 = arith.index_cast %139 : i32 to index
    %141 = memref.load %arg1[%140] : memref<64xi32, #tpu.memory_space<smem>>
    %142 = arith.index_cast %141 : i32 to index
    %c0_65 = arith.constant 0 : index
    %143 = vector.load %arg3[%142, %c0_65] : memref<2048x32xf32, #tpu.memory_space<vmem>>, vector<1x32xf32>
    %c50 = arith.constant 50 : index
    %c0_66 = arith.constant 0 : index
    %144 = vector.load %arg9[%c50, %c0_66] : memref<64x32xf32, #tpu.memory_space<vmem>>, vector<1x32xf32>
    tpu.vector_store %arg9[%c50, %c0_66], %143 {strides = array<i32>} : memref<64x32xf32, #tpu.memory_space<vmem>>, vector<1x32xf32>,
    %c7_i32_67 = arith.constant 7 : i32
    %145 = arith.addi %102, %c7_i32_67 : i32
    %146 = arith.index_cast %145 : i32 to index
    %147 = memref.load %arg1[%146] : memref<64xi32, #tpu.memory_space<smem>>
    %148 = arith.index_cast %147 : i32 to index
    %c0_68 = arith.constant 0 : index
    %149 = vector.load %arg3[%148, %c0_68] : memref<2048x32xf32, #tpu.memory_space<vmem>>, vector<1x32xf32>
    %c58 = arith.constant 58 : index
    %c0_69 = arith.constant 0 : index
    %150 = vector.load %arg9[%c58, %c0_69] : memref<64x32xf32, #tpu.memory_space<vmem>>, vector<1x32xf32>
    tpu.vector_store %arg9[%c58, %c0_69], %149 {strides = array<i32>} : memref<64x32xf32, #tpu.memory_space<vmem>>, vector<1x32xf32>,
    %c3_i32_70 = arith.constant 3 : i32
    %151 = arith.addi %0, %c3_i32_70 : i32
    %c8_i32_71 = arith.constant 8 : i32
    %152 = arith.muli %151, %c8_i32_71 : i32
    %c0_i32_72 = arith.constant 0 : i32
    %153 = arith.addi %152, %c0_i32_72 : i32
    %154 = arith.index_cast %153 : i32 to index
    %155 = memref.load %arg1[%154] : memref<64xi32, #tpu.memory_space<smem>>
    %156 = arith.index_cast %155 : i32 to index
    %c0_73 = arith.constant 0 : index
    %157 = vector.load %arg3[%156, %c0_73] : memref<2048x32xf32, #tpu.memory_space<vmem>>, vector<1x32xf32>
    %c3 = arith.constant 3 : index
    %c0_74 = arith.constant 0 : index
    %158 = vector.load %arg9[%c3, %c0_74] : memref<64x32xf32, #tpu.memory_space<vmem>>, vector<1x32xf32>
    tpu.vector_store %arg9[%c3, %c0_74], %157 {strides = array<i32>} : memref<64x32xf32, #tpu.memory_space<vmem>>, vector<1x32xf32>,
    %c1_i32_75 = arith.constant 1 : i32
    %159 = arith.addi %152, %c1_i32_75 : i32
    %160 = arith.index_cast %159 : i32 to index
    %161 = memref.load %arg1[%160] : memref<64xi32, #tpu.memory_space<smem>>
    %162 = arith.index_cast %161 : i32 to index
    %c0_76 = arith.constant 0 : index
    %163 = vector.load %arg3[%162, %c0_76] : memref<2048x32xf32, #tpu.memory_space<vmem>>, vector<1x32xf32>
    %c11 = arith.constant 11 : index
    %c0_77 = arith.constant 0 : index
    %164 = vector.load %arg9[%c11, %c0_77] : memref<64x32xf32, #tpu.memory_space<vmem>>, vector<1x32xf32>
    tpu.vector_store %arg9[%c11, %c0_77], %163 {strides = array<i32>} : memref<64x32xf32, #tpu.memory_space<vmem>>, vector<1x32xf32>,
    %c2_i32_78 = arith.constant 2 : i32
    %165 = arith.addi %152, %c2_i32_78 : i32
    %166 = arith.index_cast %165 : i32 to index
    %167 = memref.load %arg1[%166] : memref<64xi32, #tpu.memory_space<smem>>
    %168 = arith.index_cast %167 : i32 to index
    %c0_79 = arith.constant 0 : index
    %169 = vector.load %arg3[%168, %c0_79] : memref<2048x32xf32, #tpu.memory_space<vmem>>, vector<1x32xf32>
    %c19 = arith.constant 19 : index
    %c0_80 = arith.constant 0 : index
    %170 = vector.load %arg9[%c19, %c0_80] : memref<64x32xf32, #tpu.memory_space<vmem>>, vector<1x32xf32>
    tpu.vector_store %arg9[%c19, %c0_80], %169 {strides = array<i32>} : memref<64x32xf32, #tpu.memory_space<vmem>>, vector<1x32xf32>,
    %c3_i32_81 = arith.constant 3 : i32
    %171 = arith.addi %152, %c3_i32_81 : i32
    %172 = arith.index_cast %171 : i32 to index
    %173 = memref.load %arg1[%172] : memref<64xi32, #tpu.memory_space<smem>>
    %174 = arith.index_cast %173 : i32 to index
    %c0_82 = arith.constant 0 : index
    %175 = vector.load %arg3[%174, %c0_82] : memref<2048x32xf32, #tpu.memory_space<vmem>>, vector<1x32xf32>
    %c27 = arith.constant 27 : index
    %c0_83 = arith.constant 0 : index
    %176 = vector.load %arg9[%c27, %c0_83] : memref<64x32xf32, #tpu.memory_space<vmem>>, vector<1x32xf32>
    tpu.vector_store %arg9[%c27, %c0_83], %175 {strides = array<i32>} : memref<64x32xf32, #tpu.memory_space<vmem>>, vector<1x32xf32>,
    %c4_i32_84 = arith.constant 4 : i32
    %177 = arith.addi %152, %c4_i32_84 : i32
    %178 = arith.index_cast %177 : i32 to index
    %179 = memref.load %arg1[%178] : memref<64xi32, #tpu.memory_space<smem>>
    %180 = arith.index_cast %179 : i32 to index
    %c0_85 = arith.constant 0 : index
    %181 = vector.load %arg3[%180, %c0_85] : memref<2048x32xf32, #tpu.memory_space<vmem>>, vector<1x32xf32>
    %c35 = arith.constant 35 : index
    %c0_86 = arith.constant 0 : index
    %182 = vector.load %arg9[%c35, %c0_86] : memref<64x32xf32, #tpu.memory_space<vmem>>, vector<1x32xf32>
    tpu.vector_store %arg9[%c35, %c0_86], %181 {strides = array<i32>} : memref<64x32xf32, #tpu.memory_space<vmem>>, vector<1x32xf32>,
    %c5_i32_87 = arith.constant 5 : i32
    %183 = arith.addi %152, %c5_i32_87 : i32
    %184 = arith.index_cast %183 : i32 to index
    %185 = memref.load %arg1[%184] : memref<64xi32, #tpu.memory_space<smem>>
    %186 = arith.index_cast %185 : i32 to index
    %c0_88 = arith.constant 0 : index
    %187 = vector.load %arg3[%186, %c0_88] : memref<2048x32xf32, #tpu.memory_space<vmem>>, vector<1x32xf32>
    %c43 = arith.constant 43 : index
    %c0_89 = arith.constant 0 : index
    %188 = vector.load %arg9[%c43, %c0_89] : memref<64x32xf32, #tpu.memory_space<vmem>>, vector<1x32xf32>
    tpu.vector_store %arg9[%c43, %c0_89], %187 {strides = array<i32>} : memref<64x32xf32, #tpu.memory_space<vmem>>, vector<1x32xf32>,
    %c6_i32_90 = arith.constant 6 : i32
    %189 = arith.addi %152, %c6_i32_90 : i32
    %190 = arith.index_cast %189 : i32 to index
    %191 = memref.load %arg1[%190] : memref<64xi32, #tpu.memory_space<smem>>
    %192 = arith.index_cast %191 : i32 to index
    %c0_91 = arith.constant 0 : index
    %193 = vector.load %arg3[%192, %c0_91] : memref<2048x32xf32, #tpu.memory_space<vmem>>, vector<1x32xf32>
    %c51 = arith.constant 51 : index
    %c0_92 = arith.constant 0 : index
    %194 = vector.load %arg9[%c51, %c0_92] : memref<64x32xf32, #tpu.memory_space<vmem>>, vector<1x32xf32>
    tpu.vector_store %arg9[%c51, %c0_92], %193 {strides = array<i32>} : memref<64x32xf32, #tpu.memory_space<vmem>>, vector<1x32xf32>,
    %c7_i32_93 = arith.constant 7 : i32
    %195 = arith.addi %152, %c7_i32_93 : i32
    %196 = arith.index_cast %195 : i32 to index
    %197 = memref.load %arg1[%196] : memref<64xi32, #tpu.memory_space<smem>>
    %198 = arith.index_cast %197 : i32 to index
    %c0_94 = arith.constant 0 : index
    %199 = vector.load %arg3[%198, %c0_94] : memref<2048x32xf32, #tpu.memory_space<vmem>>, vector<1x32xf32>
    %c59 = arith.constant 59 : index
    %c0_95 = arith.constant 0 : index
    %200 = vector.load %arg9[%c59, %c0_95] : memref<64x32xf32, #tpu.memory_space<vmem>>, vector<1x32xf32>
    tpu.vector_store %arg9[%c59, %c0_95], %199 {strides = array<i32>} : memref<64x32xf32, #tpu.memory_space<vmem>>, vector<1x32xf32>,
    %c4_i32_96 = arith.constant 4 : i32
    %201 = arith.addi %0, %c4_i32_96 : i32
    %c8_i32_97 = arith.constant 8 : i32
    %202 = arith.muli %201, %c8_i32_97 : i32
    %c0_i32_98 = arith.constant 0 : i32
    %203 = arith.addi %202, %c0_i32_98 : i32
    %204 = arith.index_cast %203 : i32 to index
    %205 = memref.load %arg1[%204] : memref<64xi32, #tpu.memory_space<smem>>
    %206 = arith.index_cast %205 : i32 to index
    %c0_99 = arith.constant 0 : index
    %207 = vector.load %arg3[%206, %c0_99] : memref<2048x32xf32, #tpu.memory_space<vmem>>, vector<1x32xf32>
    %c4 = arith.constant 4 : index
    %c0_100 = arith.constant 0 : index
    %208 = vector.load %arg9[%c4, %c0_100] : memref<64x32xf32, #tpu.memory_space<vmem>>, vector<1x32xf32>
    tpu.vector_store %arg9[%c4, %c0_100], %207 {strides = array<i32>} : memref<64x32xf32, #tpu.memory_space<vmem>>, vector<1x32xf32>,
    %c1_i32_101 = arith.constant 1 : i32
    %209 = arith.addi %202, %c1_i32_101 : i32
    %210 = arith.index_cast %209 : i32 to index
    %211 = memref.load %arg1[%210] : memref<64xi32, #tpu.memory_space<smem>>
    %212 = arith.index_cast %211 : i32 to index
    %c0_102 = arith.constant 0 : index
    %213 = vector.load %arg3[%212, %c0_102] : memref<2048x32xf32, #tpu.memory_space<vmem>>, vector<1x32xf32>
    %c12 = arith.constant 12 : index
    %c0_103 = arith.constant 0 : index
    %214 = vector.load %arg9[%c12, %c0_103] : memref<64x32xf32, #tpu.memory_space<vmem>>, vector<1x32xf32>
    tpu.vector_store %arg9[%c12, %c0_103], %213 {strides = array<i32>} : memref<64x32xf32, #tpu.memory_space<vmem>>, vector<1x32xf32>,
    %c2_i32_104 = arith.constant 2 : i32
    %215 = arith.addi %202, %c2_i32_104 : i32
    %216 = arith.index_cast %215 : i32 to index
    %217 = memref.load %arg1[%216] : memref<64xi32, #tpu.memory_space<smem>>
    %218 = arith.index_cast %217 : i32 to index
    %c0_105 = arith.constant 0 : index
    %219 = vector.load %arg3[%218, %c0_105] : memref<2048x32xf32, #tpu.memory_space<vmem>>, vector<1x32xf32>
    %c20 = arith.constant 20 : index
    %c0_106 = arith.constant 0 : index
    %220 = vector.load %arg9[%c20, %c0_106] : memref<64x32xf32, #tpu.memory_space<vmem>>, vector<1x32xf32>
    tpu.vector_store %arg9[%c20, %c0_106], %219 {strides = array<i32>} : memref<64x32xf32, #tpu.memory_space<vmem>>, vector<1x32xf32>,
    %c3_i32_107 = arith.constant 3 : i32
    %221 = arith.addi %202, %c3_i32_107 : i32
    %222 = arith.index_cast %221 : i32 to index
    %223 = memref.load %arg1[%222] : memref<64xi32, #tpu.memory_space<smem>>
    %224 = arith.index_cast %223 : i32 to index
    %c0_108 = arith.constant 0 : index
    %225 = vector.load %arg3[%224, %c0_108] : memref<2048x32xf32, #tpu.memory_space<vmem>>, vector<1x32xf32>
    %c28 = arith.constant 28 : index
    %c0_109 = arith.constant 0 : index
    %226 = vector.load %arg9[%c28, %c0_109] : memref<64x32xf32, #tpu.memory_space<vmem>>, vector<1x32xf32>
    tpu.vector_store %arg9[%c28, %c0_109], %225 {strides = array<i32>} : memref<64x32xf32, #tpu.memory_space<vmem>>, vector<1x32xf32>,
    %c4_i32_110 = arith.constant 4 : i32
    %227 = arith.addi %202, %c4_i32_110 : i32
    %228 = arith.index_cast %227 : i32 to index
    %229 = memref.load %arg1[%228] : memref<64xi32, #tpu.memory_space<smem>>
    %230 = arith.index_cast %229 : i32 to index
    %c0_111 = arith.constant 0 : index
    %231 = vector.load %arg3[%230, %c0_111] : memref<2048x32xf32, #tpu.memory_space<vmem>>, vector<1x32xf32>
    %c36 = arith.constant 36 : index
    %c0_112 = arith.constant 0 : index
    %232 = vector.load %arg9[%c36, %c0_112] : memref<64x32xf32, #tpu.memory_space<vmem>>, vector<1x32xf32>
    tpu.vector_store %arg9[%c36, %c0_112], %231 {strides = array<i32>} : memref<64x32xf32, #tpu.memory_space<vmem>>, vector<1x32xf32>,
    %c5_i32_113 = arith.constant 5 : i32
    %233 = arith.addi %202, %c5_i32_113 : i32
    %234 = arith.index_cast %233 : i32 to index
    %235 = memref.load %arg1[%234] : memref<64xi32, #tpu.memory_space<smem>>
    %236 = arith.index_cast %235 : i32 to index
    %c0_114 = arith.constant 0 : index
    %237 = vector.load %arg3[%236, %c0_114] : memref<2048x32xf32, #tpu.memory_space<vmem>>, vector<1x32xf32>
    %c44 = arith.constant 44 : index
    %c0_115 = arith.constant 0 : index
    %238 = vector.load %arg9[%c44, %c0_115] : memref<64x32xf32, #tpu.memory_space<vmem>>, vector<1x32xf32>
    tpu.vector_store %arg9[%c44, %c0_115], %237 {strides = array<i32>} : memref<64x32xf32, #tpu.memory_space<vmem>>, vector<1x32xf32>,
    %c6_i32_116 = arith.constant 6 : i32
    %239 = arith.addi %202, %c6_i32_116 : i32
    %240 = arith.index_cast %239 : i32 to index
    %241 = memref.load %arg1[%240] : memref<64xi32, #tpu.memory_space<smem>>
    %242 = arith.index_cast %241 : i32 to index
    %c0_117 = arith.constant 0 : index
    %243 = vector.load %arg3[%242, %c0_117] : memref<2048x32xf32, #tpu.memory_space<vmem>>, vector<1x32xf32>
    %c52 = arith.constant 52 : index
    %c0_118 = arith.constant 0 : index
    %244 = vector.load %arg9[%c52, %c0_118] : memref<64x32xf32, #tpu.memory_space<vmem>>, vector<1x32xf32>
    tpu.vector_store %arg9[%c52, %c0_118], %243 {strides = array<i32>} : memref<64x32xf32, #tpu.memory_space<vmem>>, vector<1x32xf32>,
    %c7_i32_119 = arith.constant 7 : i32
    %245 = arith.addi %202, %c7_i32_119 : i32
    %246 = arith.index_cast %245 : i32 to index
    %247 = memref.load %arg1[%246] : memref<64xi32, #tpu.memory_space<smem>>
    %248 = arith.index_cast %247 : i32 to index
    %c0_120 = arith.constant 0 : index
    %249 = vector.load %arg3[%248, %c0_120] : memref<2048x32xf32, #tpu.memory_space<vmem>>, vector<1x32xf32>
    %c60 = arith.constant 60 : index
    %c0_121 = arith.constant 0 : index
    %250 = vector.load %arg9[%c60, %c0_121] : memref<64x32xf32, #tpu.memory_space<vmem>>, vector<1x32xf32>
    tpu.vector_store %arg9[%c60, %c0_121], %249 {strides = array<i32>} : memref<64x32xf32, #tpu.memory_space<vmem>>, vector<1x32xf32>,
    %c5_i32_122 = arith.constant 5 : i32
    %251 = arith.addi %0, %c5_i32_122 : i32
    %c8_i32_123 = arith.constant 8 : i32
    %252 = arith.muli %251, %c8_i32_123 : i32
    %c0_i32_124 = arith.constant 0 : i32
    %253 = arith.addi %252, %c0_i32_124 : i32
    %254 = arith.index_cast %253 : i32 to index
    %255 = memref.load %arg1[%254] : memref<64xi32, #tpu.memory_space<smem>>
    %256 = arith.index_cast %255 : i32 to index
    %c0_125 = arith.constant 0 : index
    %257 = vector.load %arg3[%256, %c0_125] : memref<2048x32xf32, #tpu.memory_space<vmem>>, vector<1x32xf32>
    %c5 = arith.constant 5 : index
    %c0_126 = arith.constant 0 : index
    %258 = vector.load %arg9[%c5, %c0_126] : memref<64x32xf32, #tpu.memory_space<vmem>>, vector<1x32xf32>
    tpu.vector_store %arg9[%c5, %c0_126], %257 {strides = array<i32>} : memref<64x32xf32, #tpu.memory_space<vmem>>, vector<1x32xf32>,
    %c1_i32_127 = arith.constant 1 : i32
    %259 = arith.addi %252, %c1_i32_127 : i32
    %260 = arith.index_cast %259 : i32 to index
    %261 = memref.load %arg1[%260] : memref<64xi32, #tpu.memory_space<smem>>
    %262 = arith.index_cast %261 : i32 to index
    %c0_128 = arith.constant 0 : index
    %263 = vector.load %arg3[%262, %c0_128] : memref<2048x32xf32, #tpu.memory_space<vmem>>, vector<1x32xf32>
    %c13 = arith.constant 13 : index
    %c0_129 = arith.constant 0 : index
    %264 = vector.load %arg9[%c13, %c0_129] : memref<64x32xf32, #tpu.memory_space<vmem>>, vector<1x32xf32>
    tpu.vector_store %arg9[%c13, %c0_129], %263 {strides = array<i32>} : memref<64x32xf32, #tpu.memory_space<vmem>>, vector<1x32xf32>,
    %c2_i32_130 = arith.constant 2 : i32
    %265 = arith.addi %252, %c2_i32_130 : i32
    %266 = arith.index_cast %265 : i32 to index
    %267 = memref.load %arg1[%266] : memref<64xi32, #tpu.memory_space<smem>>
    %268 = arith.index_cast %267 : i32 to index
    %c0_131 = arith.constant 0 : index
    %269 = vector.load %arg3[%268, %c0_131] : memref<2048x32xf32, #tpu.memory_space<vmem>>, vector<1x32xf32>
    %c21 = arith.constant 21 : index
    %c0_132 = arith.constant 0 : index
    %270 = vector.load %arg9[%c21, %c0_132] : memref<64x32xf32, #tpu.memory_space<vmem>>, vector<1x32xf32>
    tpu.vector_store %arg9[%c21, %c0_132], %269 {strides = array<i32>} : memref<64x32xf32, #tpu.memory_space<vmem>>, vector<1x32xf32>,
    %c3_i32_133 = arith.constant 3 : i32
    %271 = arith.addi %252, %c3_i32_133 : i32
    %272 = arith.index_cast %271 : i32 to index
    %273 = memref.load %arg1[%272] : memref<64xi32, #tpu.memory_space<smem>>
    %274 = arith.index_cast %273 : i32 to index
    %c0_134 = arith.constant 0 : index
    %275 = vector.load %arg3[%274, %c0_134] : memref<2048x32xf32, #tpu.memory_space<vmem>>, vector<1x32xf32>
    %c29 = arith.constant 29 : index
    %c0_135 = arith.constant 0 : index
    %276 = vector.load %arg9[%c29, %c0_135] : memref<64x32xf32, #tpu.memory_space<vmem>>, vector<1x32xf32>
    tpu.vector_store %arg9[%c29, %c0_135], %275 {strides = array<i32>} : memref<64x32xf32, #tpu.memory_space<vmem>>, vector<1x32xf32>,
    %c4_i32_136 = arith.constant 4 : i32
    %277 = arith.addi %252, %c4_i32_136 : i32
    %278 = arith.index_cast %277 : i32 to index
    %279 = memref.load %arg1[%278] : memref<64xi32, #tpu.memory_space<smem>>
    %280 = arith.index_cast %279 : i32 to index
    %c0_137 = arith.constant 0 : index
    %281 = vector.load %arg3[%280, %c0_137] : memref<2048x32xf32, #tpu.memory_space<vmem>>, vector<1x32xf32>
    %c37 = arith.constant 37 : index
    %c0_138 = arith.constant 0 : index
    %282 = vector.load %arg9[%c37, %c0_138] : memref<64x32xf32, #tpu.memory_space<vmem>>, vector<1x32xf32>
    tpu.vector_store %arg9[%c37, %c0_138], %281 {strides = array<i32>} : memref<64x32xf32, #tpu.memory_space<vmem>>, vector<1x32xf32>,
    %c5_i32_139 = arith.constant 5 : i32
    %283 = arith.addi %252, %c5_i32_139 : i32
    %284 = arith.index_cast %283 : i32 to index
    %285 = memref.load %arg1[%284] : memref<64xi32, #tpu.memory_space<smem>>
    %286 = arith.index_cast %285 : i32 to index
    %c0_140 = arith.constant 0 : index
    %287 = vector.load %arg3[%286, %c0_140] : memref<2048x32xf32, #tpu.memory_space<vmem>>, vector<1x32xf32>
    %c45 = arith.constant 45 : index
    %c0_141 = arith.constant 0 : index
    %288 = vector.load %arg9[%c45, %c0_141] : memref<64x32xf32, #tpu.memory_space<vmem>>, vector<1x32xf32>
    tpu.vector_store %arg9[%c45, %c0_141], %287 {strides = array<i32>} : memref<64x32xf32, #tpu.memory_space<vmem>>, vector<1x32xf32>,
    %c6_i32_142 = arith.constant 6 : i32
    %289 = arith.addi %252, %c6_i32_142 : i32
    %290 = arith.index_cast %289 : i32 to index
    %291 = memref.load %arg1[%290] : memref<64xi32, #tpu.memory_space<smem>>
    %292 = arith.index_cast %291 : i32 to index
    %c0_143 = arith.constant 0 : index
    %293 = vector.load %arg3[%292, %c0_143] : memref<2048x32xf32, #tpu.memory_space<vmem>>, vector<1x32xf32>
    %c53 = arith.constant 53 : index
    %c0_144 = arith.constant 0 : index
    %294 = vector.load %arg9[%c53, %c0_144] : memref<64x32xf32, #tpu.memory_space<vmem>>, vector<1x32xf32>
    tpu.vector_store %arg9[%c53, %c0_144], %293 {strides = array<i32>} : memref<64x32xf32, #tpu.memory_space<vmem>>, vector<1x32xf32>,
    %c7_i32_145 = arith.constant 7 : i32
    %295 = arith.addi %252, %c7_i32_145 : i32
    %296 = arith.index_cast %295 : i32 to index
    %297 = memref.load %arg1[%296] : memref<64xi32, #tpu.memory_space<smem>>
    %298 = arith.index_cast %297 : i32 to index
    %c0_146 = arith.constant 0 : index
    %299 = vector.load %arg3[%298, %c0_146] : memref<2048x32xf32, #tpu.memory_space<vmem>>, vector<1x32xf32>
    %c61 = arith.constant 61 : index
    %c0_147 = arith.constant 0 : index
    %300 = vector.load %arg9[%c61, %c0_147] : memref<64x32xf32, #tpu.memory_space<vmem>>, vector<1x32xf32>
    tpu.vector_store %arg9[%c61, %c0_147], %299 {strides = array<i32>} : memref<64x32xf32, #tpu.memory_space<vmem>>, vector<1x32xf32>,
    %c6_i32_148 = arith.constant 6 : i32
    %301 = arith.addi %0, %c6_i32_148 : i32
    %c8_i32_149 = arith.constant 8 : i32
    %302 = arith.muli %301, %c8_i32_149 : i32
    %c0_i32_150 = arith.constant 0 : i32
    %303 = arith.addi %302, %c0_i32_150 : i32
    %304 = arith.index_cast %303 : i32 to index
    %305 = memref.load %arg1[%304] : memref<64xi32, #tpu.memory_space<smem>>
    %306 = arith.index_cast %305 : i32 to index
    %c0_151 = arith.constant 0 : index
    %307 = vector.load %arg3[%306, %c0_151] : memref<2048x32xf32, #tpu.memory_space<vmem>>, vector<1x32xf32>
    %c6 = arith.constant 6 : index
    %c0_152 = arith.constant 0 : index
    %308 = vector.load %arg9[%c6, %c0_152] : memref<64x32xf32, #tpu.memory_space<vmem>>, vector<1x32xf32>
    tpu.vector_store %arg9[%c6, %c0_152], %307 {strides = array<i32>} : memref<64x32xf32, #tpu.memory_space<vmem>>, vector<1x32xf32>,
    %c1_i32_153 = arith.constant 1 : i32
    %309 = arith.addi %302, %c1_i32_153 : i32
    %310 = arith.index_cast %309 : i32 to index
    %311 = memref.load %arg1[%310] : memref<64xi32, #tpu.memory_space<smem>>
    %312 = arith.index_cast %311 : i32 to index
    %c0_154 = arith.constant 0 : index
    %313 = vector.load %arg3[%312, %c0_154] : memref<2048x32xf32, #tpu.memory_space<vmem>>, vector<1x32xf32>
    %c14 = arith.constant 14 : index
    %c0_155 = arith.constant 0 : index
    %314 = vector.load %arg9[%c14, %c0_155] : memref<64x32xf32, #tpu.memory_space<vmem>>, vector<1x32xf32>
    tpu.vector_store %arg9[%c14, %c0_155], %313 {strides = array<i32>} : memref<64x32xf32, #tpu.memory_space<vmem>>, vector<1x32xf32>,
    %c2_i32_156 = arith.constant 2 : i32
    %315 = arith.addi %302, %c2_i32_156 : i32
    %316 = arith.index_cast %315 : i32 to index
    %317 = memref.load %arg1[%316] : memref<64xi32, #tpu.memory_space<smem>>
    %318 = arith.index_cast %317 : i32 to index
    %c0_157 = arith.constant 0 : index
    %319 = vector.load %arg3[%318, %c0_157] : memref<2048x32xf32, #tpu.memory_space<vmem>>, vector<1x32xf32>
    %c22 = arith.constant 22 : index
    %c0_158 = arith.constant 0 : index
    %320 = vector.load %arg9[%c22, %c0_158] : memref<64x32xf32, #tpu.memory_space<vmem>>, vector<1x32xf32>
    tpu.vector_store %arg9[%c22, %c0_158], %319 {strides = array<i32>} : memref<64x32xf32, #tpu.memory_space<vmem>>, vector<1x32xf32>,
    %c3_i32_159 = arith.constant 3 : i32
    %321 = arith.addi %302, %c3_i32_159 : i32
    %322 = arith.index_cast %321 : i32 to index
    %323 = memref.load %arg1[%322] : memref<64xi32, #tpu.memory_space<smem>>
    %324 = arith.index_cast %323 : i32 to index
    %c0_160 = arith.constant 0 : index
    %325 = vector.load %arg3[%324, %c0_160] : memref<2048x32xf32, #tpu.memory_space<vmem>>, vector<1x32xf32>
    %c30 = arith.constant 30 : index
    %c0_161 = arith.constant 0 : index
    %326 = vector.load %arg9[%c30, %c0_161] : memref<64x32xf32, #tpu.memory_space<vmem>>, vector<1x32xf32>
    tpu.vector_store %arg9[%c30, %c0_161], %325 {strides = array<i32>} : memref<64x32xf32, #tpu.memory_space<vmem>>, vector<1x32xf32>,
    %c4_i32_162 = arith.constant 4 : i32
    %327 = arith.addi %302, %c4_i32_162 : i32
    %328 = arith.index_cast %327 : i32 to index
    %329 = memref.load %arg1[%328] : memref<64xi32, #tpu.memory_space<smem>>
    %330 = arith.index_cast %329 : i32 to index
    %c0_163 = arith.constant 0 : index
    %331 = vector.load %arg3[%330, %c0_163] : memref<2048x32xf32, #tpu.memory_space<vmem>>, vector<1x32xf32>
    %c38 = arith.constant 38 : index
    %c0_164 = arith.constant 0 : index
    %332 = vector.load %arg9[%c38, %c0_164] : memref<64x32xf32, #tpu.memory_space<vmem>>, vector<1x32xf32>
    tpu.vector_store %arg9[%c38, %c0_164], %331 {strides = array<i32>} : memref<64x32xf32, #tpu.memory_space<vmem>>, vector<1x32xf32>,
    %c5_i32_165 = arith.constant 5 : i32
    %333 = arith.addi %302, %c5_i32_165 : i32
    %334 = arith.index_cast %333 : i32 to index
    %335 = memref.load %arg1[%334] : memref<64xi32, #tpu.memory_space<smem>>
    %336 = arith.index_cast %335 : i32 to index
    %c0_166 = arith.constant 0 : index
    %337 = vector.load %arg3[%336, %c0_166] : memref<2048x32xf32, #tpu.memory_space<vmem>>, vector<1x32xf32>
    %c46 = arith.constant 46 : index
    %c0_167 = arith.constant 0 : index
    %338 = vector.load %arg9[%c46, %c0_167] : memref<64x32xf32, #tpu.memory_space<vmem>>, vector<1x32xf32>
    tpu.vector_store %arg9[%c46, %c0_167], %337 {strides = array<i32>} : memref<64x32xf32, #tpu.memory_space<vmem>>, vector<1x32xf32>,
    %c6_i32_168 = arith.constant 6 : i32
    %339 = arith.addi %302, %c6_i32_168 : i32
    %340 = arith.index_cast %339 : i32 to index
    %341 = memref.load %arg1[%340] : memref<64xi32, #tpu.memory_space<smem>>
    %342 = arith.index_cast %341 : i32 to index
    %c0_169 = arith.constant 0 : index
    %343 = vector.load %arg3[%342, %c0_169] : memref<2048x32xf32, #tpu.memory_space<vmem>>, vector<1x32xf32>
    %c54 = arith.constant 54 : index
    %c0_170 = arith.constant 0 : index
    %344 = vector.load %arg9[%c54, %c0_170] : memref<64x32xf32, #tpu.memory_space<vmem>>, vector<1x32xf32>
    tpu.vector_store %arg9[%c54, %c0_170], %343 {strides = array<i32>} : memref<64x32xf32, #tpu.memory_space<vmem>>, vector<1x32xf32>,
    %c7_i32_171 = arith.constant 7 : i32
    %345 = arith.addi %302, %c7_i32_171 : i32
    %346 = arith.index_cast %345 : i32 to index
    %347 = memref.load %arg1[%346] : memref<64xi32, #tpu.memory_space<smem>>
    %348 = arith.index_cast %347 : i32 to index
    %c0_172 = arith.constant 0 : index
    %349 = vector.load %arg3[%348, %c0_172] : memref<2048x32xf32, #tpu.memory_space<vmem>>, vector<1x32xf32>
    %c62 = arith.constant 62 : index
    %c0_173 = arith.constant 0 : index
    %350 = vector.load %arg9[%c62, %c0_173] : memref<64x32xf32, #tpu.memory_space<vmem>>, vector<1x32xf32>
    tpu.vector_store %arg9[%c62, %c0_173], %349 {strides = array<i32>} : memref<64x32xf32, #tpu.memory_space<vmem>>, vector<1x32xf32>,
    %c7_i32_174 = arith.constant 7 : i32
    %351 = arith.addi %0, %c7_i32_174 : i32
    %c8_i32_175 = arith.constant 8 : i32
    %352 = arith.muli %351, %c8_i32_175 : i32
    %c0_i32_176 = arith.constant 0 : i32
    %353 = arith.addi %352, %c0_i32_176 : i32
    %354 = arith.index_cast %353 : i32 to index
    %355 = memref.load %arg1[%354] : memref<64xi32, #tpu.memory_space<smem>>
    %356 = arith.index_cast %355 : i32 to index
    %c0_177 = arith.constant 0 : index
    %357 = vector.load %arg3[%356, %c0_177] : memref<2048x32xf32, #tpu.memory_space<vmem>>, vector<1x32xf32>
    %c7 = arith.constant 7 : index
    %c0_178 = arith.constant 0 : index
    %358 = vector.load %arg9[%c7, %c0_178] : memref<64x32xf32, #tpu.memory_space<vmem>>, vector<1x32xf32>
    tpu.vector_store %arg9[%c7, %c0_178], %357 {strides = array<i32>} : memref<64x32xf32, #tpu.memory_space<vmem>>, vector<1x32xf32>,
    %c1_i32_179 = arith.constant 1 : i32
    %359 = arith.addi %352, %c1_i32_179 : i32
    %360 = arith.index_cast %359 : i32 to index
    %361 = memref.load %arg1[%360] : memref<64xi32, #tpu.memory_space<smem>>
    %362 = arith.index_cast %361 : i32 to index
    %c0_180 = arith.constant 0 : index
    %363 = vector.load %arg3[%362, %c0_180] : memref<2048x32xf32, #tpu.memory_space<vmem>>, vector<1x32xf32>
    %c15 = arith.constant 15 : index
    %c0_181 = arith.constant 0 : index
    %364 = vector.load %arg9[%c15, %c0_181] : memref<64x32xf32, #tpu.memory_space<vmem>>, vector<1x32xf32>
    tpu.vector_store %arg9[%c15, %c0_181], %363 {strides = array<i32>} : memref<64x32xf32, #tpu.memory_space<vmem>>, vector<1x32xf32>,
    %c2_i32_182 = arith.constant 2 : i32
    %365 = arith.addi %352, %c2_i32_182 : i32
    %366 = arith.index_cast %365 : i32 to index
    %367 = memref.load %arg1[%366] : memref<64xi32, #tpu.memory_space<smem>>
    %368 = arith.index_cast %367 : i32 to index
    %c0_183 = arith.constant 0 : index
    %369 = vector.load %arg3[%368, %c0_183] : memref<2048x32xf32, #tpu.memory_space<vmem>>, vector<1x32xf32>
    %c23 = arith.constant 23 : index
    %c0_184 = arith.constant 0 : index
    %370 = vector.load %arg9[%c23, %c0_184] : memref<64x32xf32, #tpu.memory_space<vmem>>, vector<1x32xf32>
    tpu.vector_store %arg9[%c23, %c0_184], %369 {strides = array<i32>} : memref<64x32xf32, #tpu.memory_space<vmem>>, vector<1x32xf32>,
    %c3_i32_185 = arith.constant 3 : i32
    %371 = arith.addi %352, %c3_i32_185 : i32
    %372 = arith.index_cast %371 : i32 to index
    %373 = memref.load %arg1[%372] : memref<64xi32, #tpu.memory_space<smem>>
    %374 = arith.index_cast %373 : i32 to index
    %c0_186 = arith.constant 0 : index
    %375 = vector.load %arg3[%374, %c0_186] : memref<2048x32xf32, #tpu.memory_space<vmem>>, vector<1x32xf32>
    %c31 = arith.constant 31 : index
    %c0_187 = arith.constant 0 : index
    %376 = vector.load %arg9[%c31, %c0_187] : memref<64x32xf32, #tpu.memory_space<vmem>>, vector<1x32xf32>
    tpu.vector_store %arg9[%c31, %c0_187], %375 {strides = array<i32>} : memref<64x32xf32, #tpu.memory_space<vmem>>, vector<1x32xf32>,
    %c4_i32_188 = arith.constant 4 : i32
    %377 = arith.addi %352, %c4_i32_188 : i32
    %378 = arith.index_cast %377 : i32 to index
    %379 = memref.load %arg1[%378] : memref<64xi32, #tpu.memory_space<smem>>
    %380 = arith.index_cast %379 : i32 to index
    %c0_189 = arith.constant 0 : index
    %381 = vector.load %arg3[%380, %c0_189] : memref<2048x32xf32, #tpu.memory_space<vmem>>, vector<1x32xf32>
    %c39 = arith.constant 39 : index
    %c0_190 = arith.constant 0 : index
    %382 = vector.load %arg9[%c39, %c0_190] : memref<64x32xf32, #tpu.memory_space<vmem>>, vector<1x32xf32>
    tpu.vector_store %arg9[%c39, %c0_190], %381 {strides = array<i32>} : memref<64x32xf32, #tpu.memory_space<vmem>>, vector<1x32xf32>,
    %c5_i32_191 = arith.constant 5 : i32
    %383 = arith.addi %352, %c5_i32_191 : i32
    %384 = arith.index_cast %383 : i32 to index
    %385 = memref.load %arg1[%384] : memref<64xi32, #tpu.memory_space<smem>>
    %386 = arith.index_cast %385 : i32 to index
    %c0_192 = arith.constant 0 : index
    %387 = vector.load %arg3[%386, %c0_192] : memref<2048x32xf32, #tpu.memory_space<vmem>>, vector<1x32xf32>
    %c47 = arith.constant 47 : index
    %c0_193 = arith.constant 0 : index
    %388 = vector.load %arg9[%c47, %c0_193] : memref<64x32xf32, #tpu.memory_space<vmem>>, vector<1x32xf32>
    tpu.vector_store %arg9[%c47, %c0_193], %387 {strides = array<i32>} : memref<64x32xf32, #tpu.memory_space<vmem>>, vector<1x32xf32>,
    %c6_i32_194 = arith.constant 6 : i32
    %389 = arith.addi %352, %c6_i32_194 : i32
    %390 = arith.index_cast %389 : i32 to index
    %391 = memref.load %arg1[%390] : memref<64xi32, #tpu.memory_space<smem>>
    %392 = arith.index_cast %391 : i32 to index
    %c0_195 = arith.constant 0 : index
    %393 = vector.load %arg3[%392, %c0_195] : memref<2048x32xf32, #tpu.memory_space<vmem>>, vector<1x32xf32>
    %c55 = arith.constant 55 : index
    %c0_196 = arith.constant 0 : index
    %394 = vector.load %arg9[%c55, %c0_196] : memref<64x32xf32, #tpu.memory_space<vmem>>, vector<1x32xf32>
    tpu.vector_store %arg9[%c55, %c0_196], %393 {strides = array<i32>} : memref<64x32xf32, #tpu.memory_space<vmem>>, vector<1x32xf32>,
    %c7_i32_197 = arith.constant 7 : i32
    %395 = arith.addi %352, %c7_i32_197 : i32
    %396 = arith.index_cast %395 : i32 to index
    %397 = memref.load %arg1[%396] : memref<64xi32, #tpu.memory_space<smem>>
    %398 = arith.index_cast %397 : i32 to index
    %c0_198 = arith.constant 0 : index
    %399 = vector.load %arg3[%398, %c0_198] : memref<2048x32xf32, #tpu.memory_space<vmem>>, vector<1x32xf32>
    %c63 = arith.constant 63 : index
    %c0_199 = arith.constant 0 : index
    %400 = vector.load %arg9[%c63, %c0_199] : memref<64x32xf32, #tpu.memory_space<vmem>>, vector<1x32xf32>
    tpu.vector_store %arg9[%c63, %c0_199], %399 {strides = array<i32>} : memref<64x32xf32, #tpu.memory_space<vmem>>, vector<1x32xf32>,
    %c0_200 = arith.constant 0 : index
    %c0_201 = arith.constant 0 : index
    %401 = vector.load %arg2[%c0_200, %c0_201] : memref<8x8xi32, #tpu.memory_space<vmem>>, vector<8x8xi32>
    %c1933_i32 = arith.constant 1933 : i32
    %402 = vector.broadcast %c1933_i32 : i32 to vector<8x8xi32>
    %403 = arith.cmpi ne, %401, %402 : vector<8x8xi32>
    %404 = arith.extui %403 : vector<8x8xi1> to vector<8x8xi32>
    %405 = arith.sitofp %404 : vector<8x8xi32> to vector<8x8xf32>
    %cst = arith.constant dense<0.000000e+00> : vector<8xf32>
    %406 = vector.multi_reduction <add>, %405, %cst [1] : vector<8x8xf32> to vector<8xf32>
    %407 = vector.shape_cast %406 : vector<8xf32> to vector<8x1xf32>
    %cst_202 = arith.constant 1.000000e+00 : f32
    %408 = vector.broadcast %cst_202 : f32 to vector<8x1xf32>
    %409 = arith.maximumf %407, %408 : vector<8x1xf32>
    %c0_203 = arith.constant 0 : index
    %c0_204 = arith.constant 0 : index
    %410 = vector.load %arg9[%c0_203, %c0_204] : memref<64x32xf32, #tpu.memory_space<vmem>>, vector<64x32xf32>
    %cst_205 = arith.constant 0.000000e+00 : f32
    %411 = vector.broadcast %cst_205 : f32 to vector<8x32xf32>
    %412 = vector.extract_strided_slice %410 {offsets = [0, 0], sizes = [8, 32], strides = [1, 1]} : vector<64x32xf32> to vector<8x32xf32>
    %413 = vector.extract_strided_slice %405 {offsets = [0, 0], sizes = [8, 1], strides = [1, 1]} : vector<8x8xf32> to vector<8x1xf32>
    %414 = vector.broadcast %413 : vector<8x1xf32> to vector<8x32xf32>
    %415 = arith.mulf %412, %414 : vector<8x32xf32>
    %416 = arith.addf %411, %415 : vector<8x32xf32>
    %417 = vector.extract_strided_slice %410 {offsets = [8, 0], sizes = [8, 32], strides = [1, 1]} : vector<64x32xf32> to vector<8x32xf32>
    %418 = vector.extract_strided_slice %405 {offsets = [0, 1], sizes = [8, 1], strides = [1, 1]} : vector<8x8xf32> to vector<8x1xf32>
    %419 = vector.broadcast %418 : vector<8x1xf32> to vector<8x32xf32>
    %420 = arith.mulf %417, %419 : vector<8x32xf32>
    %421 = arith.addf %416, %420 : vector<8x32xf32>
    %422 = vector.extract_strided_slice %410 {offsets = [16, 0], sizes = [8, 32], strides = [1, 1]} : vector<64x32xf32> to vector<8x32xf32>
    %423 = vector.extract_strided_slice %405 {offsets = [0, 2], sizes = [8, 1], strides = [1, 1]} : vector<8x8xf32> to vector<8x1xf32>
    %424 = vector.broadcast %423 : vector<8x1xf32> to vector<8x32xf32>
    %425 = arith.mulf %422, %424 : vector<8x32xf32>
    %426 = arith.addf %421, %425 : vector<8x32xf32>
    %427 = vector.extract_strided_slice %410 {offsets = [24, 0], sizes = [8, 32], strides = [1, 1]} : vector<64x32xf32> to vector<8x32xf32>
    %428 = vector.extract_strided_slice %405 {offsets = [0, 3], sizes = [8, 1], strides = [1, 1]} : vector<8x8xf32> to vector<8x1xf32>
    %429 = vector.broadcast %428 : vector<8x1xf32> to vector<8x32xf32>
    %430 = arith.mulf %427, %429 : vector<8x32xf32>
    %431 = arith.addf %426, %430 : vector<8x32xf32>
    %432 = vector.extract_strided_slice %410 {offsets = [32, 0], sizes = [8, 32], strides = [1, 1]} : vector<64x32xf32> to vector<8x32xf32>
    %433 = vector.extract_strided_slice %405 {offsets = [0, 4], sizes = [8, 1], strides = [1, 1]} : vector<8x8xf32> to vector<8x1xf32>
    %434 = vector.broadcast %433 : vector<8x1xf32> to vector<8x32xf32>
    %435 = arith.mulf %432, %434 : vector<8x32xf32>
    %436 = arith.addf %431, %435 : vector<8x32xf32>
    %437 = vector.extract_strided_slice %410 {offsets = [40, 0], sizes = [8, 32], strides = [1, 1]} : vector<64x32xf32> to vector<8x32xf32>
    %438 = vector.extract_strided_slice %405 {offsets = [0, 5], sizes = [8, 1], strides = [1, 1]} : vector<8x8xf32> to vector<8x1xf32>
    %439 = vector.broadcast %438 : vector<8x1xf32> to vector<8x32xf32>
    %440 = arith.mulf %437, %439 : vector<8x32xf32>
    %441 = arith.addf %436, %440 : vector<8x32xf32>
    %442 = vector.extract_strided_slice %410 {offsets = [48, 0], sizes = [8, 32], strides = [1, 1]} : vector<64x32xf32> to vector<8x32xf32>
    %443 = vector.extract_strided_slice %405 {offsets = [0, 6], sizes = [8, 1], strides = [1, 1]} : vector<8x8xf32> to vector<8x1xf32>
    %444 = vector.broadcast %443 : vector<8x1xf32> to vector<8x32xf32>
    %445 = arith.mulf %442, %444 : vector<8x32xf32>
    %446 = arith.addf %441, %445 : vector<8x32xf32>
    %447 = vector.extract_strided_slice %410 {offsets = [56, 0], sizes = [8, 32], strides = [1, 1]} : vector<64x32xf32> to vector<8x32xf32>
    %448 = vector.extract_strided_slice %405 {offsets = [0, 7], sizes = [8, 1], strides = [1, 1]} : vector<8x8xf32> to vector<8x1xf32>
    %449 = vector.broadcast %448 : vector<8x1xf32> to vector<8x32xf32>
    %450 = arith.mulf %447, %449 : vector<8x32xf32>
    %451 = arith.addf %446, %450 : vector<8x32xf32>
    %452 = vector.broadcast %409 : vector<8x1xf32> to vector<8x32xf32>
    %453 = arith.divf %451, %452 : vector<8x32xf32>
    %c0_206 = arith.constant 0 : index
    %c0_207 = arith.constant 0 : index
    %454 = vector.load %arg4[%c0_206, %c0_207] : memref<32x128xf32, #tpu.memory_space<vmem>>, vector<32x128xf32>
    %cst_208 = arith.constant dense<0.000000e+00> : vector<8x128xf32>
    %455 = tpu.matmul %453, %454, %cst_208 {dimension_numbers = #tpu.dot_dimension_numbers<[1], [0], [0], [1], [0, 0, 1, 1], [], []>} : vector<8x32xf32>, vector<32x128xf32>, vector<8x128xf32> -> vector<8x128xf32>
    %c0_209 = arith.constant 0 : index
    %c0_210 = arith.constant 0 : index
    %456 = vector.load %arg5[%c0_209, %c0_210] : memref<1x128xf32, #tpu.memory_space<vmem>>, vector<1x128xf32>
    %457 = vector.broadcast %456 : vector<1x128xf32> to vector<8x128xf32>
    %458 = arith.addf %455, %457 : vector<8x128xf32>
    %cst_211 = arith.constant 0.000000e+00 : f32
    %459 = vector.broadcast %cst_211 : f32 to vector<8x128xf32>
    %460 = arith.maximumf %458, %459 : vector<8x128xf32>
    %c0_212 = arith.constant 0 : index
    %c0_213 = arith.constant 0 : index
    %461 = vector.load %arg6[%c0_212, %c0_213] : memref<128x128xf32, #tpu.memory_space<vmem>>, vector<128x128xf32>
    %cst_214 = arith.constant dense<0.000000e+00> : vector<8x128xf32>
    %462 = tpu.matmul %460, %461, %cst_214 {dimension_numbers = #tpu.dot_dimension_numbers<[1], [0], [0], [1], [0, 0, 1, 1], [], []>} : vector<8x128xf32>, vector<128x128xf32>, vector<8x128xf32> -> vector<8x128xf32>
    %c0_215 = arith.constant 0 : index
    %c0_216 = arith.constant 0 : index
    %463 = vector.load %arg7[%c0_215, %c0_216] : memref<1x128xf32, #tpu.memory_space<vmem>>, vector<1x128xf32>
    %464 = vector.broadcast %463 : vector<1x128xf32> to vector<8x128xf32>
    %465 = arith.addf %462, %464 : vector<8x128xf32>
    %c0_217 = arith.constant 0 : index
    %c0_218 = arith.constant 0 : index
    %466 = vector.load %arg8[%c0_217, %c0_218] : memref<8x128xf32, #tpu.memory_space<vmem>>, vector<8x128xf32>
    tpu.vector_store %arg8[%c0_217, %c0_218], %465 {strides = array<i32>} : memref<8x128xf32, #tpu.memory_space<vmem>>, vector<8x128xf32>,
    return
  }
  func.func @transform_0(%arg0: i32, %arg1: memref<64xi32, #tpu.memory_space<smem>>) -> (i32, i32) {
    %c0_i32 = arith.constant 0 : i32
    %c0_i32_0 = arith.constant 0 : i32
    return %arg0, %c0_i32 : i32, i32
  }
  func.func @transform_1(%arg0: i32, %arg1: memref<64xi32, #tpu.memory_space<smem>>) -> (i32, i32) {
    %c0_i32 = arith.constant 0 : i32
    %c0_i32_0 = arith.constant 0 : i32
    %c0_i32_1 = arith.constant 0 : i32
    return %c0_i32, %c0_i32_0 : i32, i32
  }
  func.func @transform_2(%arg0: i32, %arg1: memref<64xi32, #tpu.memory_space<smem>>) -> (i32, i32) {
    %c0_i32 = arith.constant 0 : i32
    %c0_i32_0 = arith.constant 0 : i32
    %c0_i32_1 = arith.constant 0 : i32
    return %c0_i32, %c0_i32_0 : i32, i32
  }
  func.func @transform_3(%arg0: i32, %arg1: memref<64xi32, #tpu.memory_space<smem>>) -> (i32, i32) {
    %c0_i32 = arith.constant 0 : i32
    %c0_i32_0 = arith.constant 0 : i32
    %c0_i32_1 = arith.constant 0 : i32
    return %c0_i32, %c0_i32_0 : i32, i32
  }
  func.func @transform_4(%arg0: i32, %arg1: memref<64xi32, #tpu.memory_space<smem>>) -> (i32, i32) {
    %c0_i32 = arith.constant 0 : i32
    %c0_i32_0 = arith.constant 0 : i32
    %c0_i32_1 = arith.constant 0 : i32
    return %c0_i32, %c0_i32_0 : i32, i32
  }
  func.func @transform_5(%arg0: i32, %arg1: memref<64xi32, #tpu.memory_space<smem>>) -> (i32, i32) {
    %c0_i32 = arith.constant 0 : i32
    %c0_i32_0 = arith.constant 0 : i32
    %c0_i32_1 = arith.constant 0 : i32
    return %c0_i32, %c0_i32_0 : i32, i32
  }
  func.func @transform_6(%arg0: i32, %arg1: memref<64xi32, #tpu.memory_space<smem>>) -> (i32, i32) {
    %c0_i32 = arith.constant 0 : i32
    %c0_i32_0 = arith.constant 0 : i32
    return %arg0, %c0_i32 : i32, i32
  }
}

</mosaic_0001>

<llo_original>
// kernel: ff_network_forward.1
$region0: #{ff_network_forward.1}
  #allocation0 [shape = 'u32[]', space=smem, size = 0x4, offset = 0x4, fixed_abs, tag = 'smem constant byte address 0x4 - core index']
  #allocation1 [shape = 'u32[144,128]{1,0:T(1,128)}', space=vmem, size = 0x12000, scoped, tag = 'internal scratch']
  #allocation2 [shape = 'f32[64,32]{1,0:T(8,128)}', space=vmem, size = 0x8000, scoped, tag = 'scratch operand']
  #allocation3 [shape = 's32[1]{0}', space=sflag, size = 0x4, scoped, tag = 'scoped memory for ff_network_forward.1']
  #allocation4 [shape = 'u8[512]{0}', space=smem, size = 0x200, scoped, tag = 'prefetched SMEM operand 0']
  %s0 = inlined_call_operand.vmem [shape: s32[64], index: 0, kind: input, shape index: {}]
  %s1 = inlined_call_operand.vmem [shape: s32[8,8], index: 1, kind: input, shape index: {}]
  %s2 = inlined_call_operand.vmem [shape: f32[2048,32], index: 2, kind: input, shape index: {}]
  %s3 = inlined_call_operand.vmem [shape: f32[32,128], index: 3, kind: input, shape index: {}]
  %s4 = inlined_call_operand.vmem [shape: f32[1,128], index: 4, kind: input, shape index: {}]
  %s5 = inlined_call_operand.vmem [shape: f32[128,128], index: 5, kind: input, shape index: {}]
  %s6 = inlined_call_operand.vmem [shape: f32[1,128], index: 6, kind: input, shape index: {}]
  %s7 = inlined_call_operand.vmem [shape: f32[8,128], index: 7, kind: output, shape index: {}]
  %s8 = sld [smem:[#allocation0]]
  $region34: #{ff_network_forward.1} parent=0
    _
  %s10 = ssub.s32 1, %s8
  %s11 = scalar_select 0, %s10, %s8
  %s12 = sshll.u32 %s0, 4
  %s13 = int_to_ptr.vmem [resolvable:$true] %s12
  %15 = dma.vmem_to_smem %s13, 16, [#allocation4], [#allocation3]
  %16 = dma.done [#allocation3], 16
  %17 = sfence
  // Predicated region
  $region2: #{ff_network_forward.1} parent=0 // pred_check
    _
  $region3: #{ff_network_forward.1} parent=0 // pred_check_branch
    %19 = sbr.rel (0) target = $region5
  $region4: #{ff_network_forward.1} parent=0 // pred_region
    _
  $region5: #{ff_network_forward.1} parent=0 // pred_fallthru
    _
  // Predicated region
  $region6: #{ff_network_forward.1} parent=0 // pred_check
    _
  $region7: #{ff_network_forward.1} parent=0 // pred_check_branch
    %21 = sbr.rel (0) target = $region9
  $region8: #{ff_network_forward.1} parent=0 // pred_region
    _
  $region9: #{ff_network_forward.1} parent=0 // pred_fallthru
    _
  // Predicated region
  $region10: #{ff_network_forward.1} parent=0 // pred_check
    _
  $region11: #{ff_network_forward.1} parent=0 // pred_check_branch
    %23 = sbr.rel (0) target = $region13
  $region12: #{ff_network_forward.1} parent=0 // pred_region
    _
  $region13: #{ff_network_forward.1} parent=0 // pred_fallthru
    _
  // Predicated region
  $region14: #{ff_network_forward.1} parent=0 // pred_check
    _
  $region15: #{ff_network_forward.1} parent=0 // pred_check_branch
    %25 = sbr.rel (0) target = $region17
  $region16: #{ff_network_forward.1} parent=0 // pred_region
    _
  $region17: #{ff_network_forward.1} parent=0 // pred_fallthru
    _
  // Predicated region
  $region18: #{ff_network_forward.1} parent=0 // pred_check
    _
  $region19: #{ff_network_forward.1} parent=0 // pred_check_branch
    %27 = sbr.rel (0) target = $region21
  $region20: #{ff_network_forward.1} parent=0 // pred_region
    _
  $region21: #{ff_network_forward.1} parent=0 // pred_fallthru
    _
  // Predicated region
  $region22: #{ff_network_forward.1} parent=0 // pred_check
    _
  $region23: #{ff_network_forward.1} parent=0 // pred_check_branch
    %29 = sbr.rel (0) target = $region25
  $region24: #{ff_network_forward.1} parent=0 // pred_region
    _
  $region25: #{ff_network_forward.1} parent=0 // pred_fallthru
    _
  %s30 = smul.u32 0, 8
  %s31 = smul.u32 0, 64
  %s32 = sld [smem:[#allocation4 + %s31]]
  %s33 = scalar_lea.vmem %s2, %s32
  %v34 = vld [vmem:[%s33] sm:$0x1]
  %vm35 = vcmask 253952
  %36 = vst.msk [vmem:[#allocation2] sm:$0x1] %vm35, %v34
  %s37 = sadd.s32 %s31, 1
  %s38 = sld [smem:[#allocation4 + %s37]]
  %s39 = scalar_lea.vmem %s2, %s38
  %v40 = vld [vmem:[%s39] sm:$0x1]
  %41 = vst.msk [vmem:[#allocation2 + $0x8] sm:$0x1] %vm35, %v40
  %s42 = sadd.s32 %s31, 2
  %s43 = sld [smem:[#allocation4 + %s42]]
  %s44 = scalar_lea.vmem %s2, %s43
  %v45 = vld [vmem:[%s44] sm:$0x1]
  %46 = vst.msk [vmem:[#allocation2 + $0x10] sm:$0x1] %vm35, %v45
  %s47 = sadd.s32 %s31, 3
  %s48 = sld [smem:[#allocation4 + %s47]]
  %s49 = scalar_lea.vmem %s2, %s48
  %v50 = vld [vmem:[%s49] sm:$0x1]
  %51 = vst.msk [vmem:[#allocation2 + $0x18] sm:$0x1] %vm35, %v50
  %s52 = sadd.s32 %s31, 4
  %s53 = sld [smem:[#allocation4 + %s52]]
  %s54 = scalar_lea.vmem %s2, %s53
  %v55 = vld [vmem:[%s54] sm:$0x1]
  %56 = vst.msk [vmem:[#allocation2 + $0x20] sm:$0x1] %vm35, %v55
  %s57 = sadd.s32 %s31, 5
  %s58 = sld [smem:[#allocation4 + %s57]]
  %s59 = scalar_lea.vmem %s2, %s58
  %v60 = vld [vmem:[%s59] sm:$0x1]
  %61 = vst.msk [vmem:[#allocation2 + $0x28] sm:$0x1] %vm35, %v60
  %s62 = sadd.s32 %s31, 6
  %s63 = sld [smem:[#allocation4 + %s62]]
  %s64 = scalar_lea.vmem %s2, %s63
  %v65 = vld [vmem:[%s64] sm:$0x1]
  %66 = vst.msk [vmem:[#allocation2 + $0x30] sm:$0x1] %vm35, %v65
  %s67 = sadd.s32 %s31, 7
  %s68 = sld [smem:[#allocation4 + %s67]]
  %s69 = scalar_lea.vmem %s2, %s68
  %v70 = vld [vmem:[%s69] sm:$0x1]
  %71 = vst.msk [vmem:[#allocation2 + $0x38] sm:$0x1] %vm35, %v70
  %s72 = sadd.s32 %s30, 1
  %s73 = smul.u32 %s72, 8
  %s74 = sld [smem:[#allocation4 + %s73]]
  %s75 = scalar_lea.vmem %s2, %s74
  %v76 = vld [vmem:[%s75] sm:$0x1]
  %77 = vst.msk [vmem:[#allocation2 + $0x1] sm:$0x1] %vm35, %v76
  %s78 = sadd.s32 %s73, 1
  %s79 = sld [smem:[#allocation4 + %s78]]
  %s80 = scalar_lea.vmem %s2, %s79
  %v81 = vld [vmem:[%s80] sm:$0x1]
  %82 = vst.msk [vmem:[#allocation2 + $0x9] sm:$0x1] %vm35, %v81
  %s83 = sadd.s32 %s73, 2
  %s84 = sld [smem:[#allocation4 + %s83]]
  %s85 = scalar_lea.vmem %s2, %s84
  %v86 = vld [vmem:[%s85] sm:$0x1]
  %87 = vst.msk [vmem:[#allocation2 + $0x11] sm:$0x1] %vm35, %v86
  %s88 = sadd.s32 %s73, 3
  %s89 = sld [smem:[#allocation4 + %s88]]
  %s90 = scalar_lea.vmem %s2, %s89
  %v91 = vld [vmem:[%s90] sm:$0x1]
  %92 = vst.msk [vmem:[#allocation2 + $0x19] sm:$0x1] %vm35, %v91
  %s93 = sadd.s32 %s73, 4
  %s94 = sld [smem:[#allocation4 + %s93]]
  %s95 = scalar_lea.vmem %s2, %s94
  %v96 = vld [vmem:[%s95] sm:$0x1]
  %97 = vst.msk [vmem:[#allocation2 + $0x21] sm:$0x1] %vm35, %v96
  %s98 = sadd.s32 %s73, 5
  %s99 = sld [smem:[#allocation4 + %s98]]
  %s100 = scalar_lea.vmem %s2, %s99
  %v101 = vld [vmem:[%s100] sm:$0x1]
  %102 = vst.msk [vmem:[#allocation2 + $0x29] sm:$0x1] %vm35, %v101
  %s103 = sadd.s32 %s73, 6
  %s104 = sld [smem:[#allocation4 + %s103]]
  %s105 = scalar_lea.vmem %s2, %s104
  %v106 = vld [vmem:[%s105] sm:$0x1]
  %107 = vst.msk [vmem:[#allocation2 + $0x31] sm:$0x1] %vm35, %v106
  %s108 = sadd.s32 %s73, 7
  %s109 = sld [smem:[#allocation4 + %s108]]
  %s110 = scalar_lea.vmem %s2, %s109
  %v111 = vld [vmem:[%s110] sm:$0x1]
  %112 = vst.msk [vmem:[#allocation2 + $0x39] sm:$0x1] %vm35, %v111
  %s113 = sadd.s32 %s30, 2
  %s114 = smul.u32 %s113, 8
  %s115 = sld [smem:[#allocation4 + %s114]]
  %s116 = scalar_lea.vmem %s2, %s115
  %v117 = vld [vmem:[%s116] sm:$0x1]
  %118 = vst.msk [vmem:[#allocation2 + $0x2] sm:$0x1] %vm35, %v117
  %s119 = sadd.s32 %s114, 1
  %s120 = sld [smem:[#allocation4 + %s119]]
  %s121 = scalar_lea.vmem %s2, %s120
  %v122 = vld [vmem:[%s121] sm:$0x1]
  %123 = vst.msk [vmem:[#allocation2 + $0xa] sm:$0x1] %vm35, %v122
  %s124 = sadd.s32 %s114, 2
  %s125 = sld [smem:[#allocation4 + %s124]]
  %s126 = scalar_lea.vmem %s2, %s125
  %v127 = vld [vmem:[%s126] sm:$0x1]
  %128 = vst.msk [vmem:[#allocation2 + $0x12] sm:$0x1] %vm35, %v127
  %s129 = sadd.s32 %s114, 3
  %s130 = sld [smem:[#allocation4 + %s129]]
  %s131 = scalar_lea.vmem %s2, %s130
  %v132 = vld [vmem:[%s131] sm:$0x1]
  %133 = vst.msk [vmem:[#allocation2 + $0x1a] sm:$0x1] %vm35, %v132
  %s134 = sadd.s32 %s114, 4
  %s135 = sld [smem:[#allocation4 + %s134]]
  %s136 = scalar_lea.vmem %s2, %s135
  %v137 = vld [vmem:[%s136] sm:$0x1]
  %138 = vst.msk [vmem:[#allocation2 + $0x22] sm:$0x1] %vm35, %v137
  %s139 = sadd.s32 %s114, 5
  %s140 = sld [smem:[#allocation4 + %s139]]
  %s141 = scalar_lea.vmem %s2, %s140
  %v142 = vld [vmem:[%s141] sm:$0x1]
  %143 = vst.msk [vmem:[#allocation2 + $0x2a] sm:$0x1] %vm35, %v142
  %s144 = sadd.s32 %s114, 6
  %s145 = sld [smem:[#allocation4 + %s144]]
  %s146 = scalar_lea.vmem %s2, %s145
  %v147 = vld [vmem:[%s146] sm:$0x1]
  %148 = vst.msk [vmem:[#allocation2 + $0x32] sm:$0x1] %vm35, %v147
  %s149 = sadd.s32 %s114, 7
  %s150 = sld [smem:[#allocation4 + %s149]]
  %s151 = scalar_lea.vmem %s2, %s150
  %v152 = vld [vmem:[%s151] sm:$0x1]
  %153 = vst.msk [vmem:[#allocation2 + $0x3a] sm:$0x1] %vm35, %v152
  %s154 = sadd.s32 %s30, 3
  %s155 = smul.u32 %s154, 8
  %s156 = sld [smem:[#allocation4 + %s155]]
  %s157 = scalar_lea.vmem %s2, %s156
  %v158 = vld [vmem:[%s157] sm:$0x1]
  %159 = vst.msk [vmem:[#allocation2 + $0x3] sm:$0x1] %vm35, %v158
  %s160 = sadd.s32 %s155, 1
  %s161 = sld [smem:[#allocation4 + %s160]]
  %s162 = scalar_lea.vmem %s2, %s161
  %v163 = vld [vmem:[%s162] sm:$0x1]
  %164 = vst.msk [vmem:[#allocation2 + $0xb] sm:$0x1] %vm35, %v163
  %s165 = sadd.s32 %s155, 2
  %s166 = sld [smem:[#allocation4 + %s165]]
  %s167 = scalar_lea.vmem %s2, %s166
  %v168 = vld [vmem:[%s167] sm:$0x1]
  %169 = vst.msk [vmem:[#allocation2 + $0x13] sm:$0x1] %vm35, %v168
  %s170 = sadd.s32 %s155, 3
  %s171 = sld [smem:[#allocation4 + %s170]]
  %s172 = scalar_lea.vmem %s2, %s171
  %v173 = vld [vmem:[%s172] sm:$0x1]
  %174 = vst.msk [vmem:[#allocation2 + $0x1b] sm:$0x1] %vm35, %v173
  %s175 = sadd.s32 %s155, 4
  %s176 = sld [smem:[#allocation4 + %s175]]
  %s177 = scalar_lea.vmem %s2, %s176
  %v178 = vld [vmem:[%s177] sm:$0x1]
  %179 = vst.msk [vmem:[#allocation2 + $0x23] sm:$0x1] %vm35, %v178
  %s180 = sadd.s32 %s155, 5
  %s181 = sld [smem:[#allocation4 + %s180]]
  %s182 = scalar_lea.vmem %s2, %s181
  %v183 = vld [vmem:[%s182] sm:$0x1]
  %184 = vst.msk [vmem:[#allocation2 + $0x2b] sm:$0x1] %vm35, %v183
  %s185 = sadd.s32 %s155, 6
  %s186 = sld [smem:[#allocation4 + %s185]]
  %s187 = scalar_lea.vmem %s2, %s186
  %v188 = vld [vmem:[%s187] sm:$0x1]
  %189 = vst.msk [vmem:[#allocation2 + $0x33] sm:$0x1] %vm35, %v188
  %s190 = sadd.s32 %s155, 7
  %s191 = sld [smem:[#allocation4 + %s190]]
  %s192 = scalar_lea.vmem %s2, %s191
  %v193 = vld [vmem:[%s192] sm:$0x1]
  %194 = vst.msk [vmem:[#allocation2 + $0x3b] sm:$0x1] %vm35, %v193
  %s195 = sadd.s32 %s30, 4
  %s196 = smul.u32 %s195, 8
  %s197 = sld [smem:[#allocation4 + %s196]]
  %s198 = scalar_lea.vmem %s2, %s197
  %v199 = vld [vmem:[%s198] sm:$0x1]
  %200 = vst.msk [vmem:[#allocation2 + $0x4] sm:$0x1] %vm35, %v199
  %s201 = sadd.s32 %s196, 1
  %s202 = sld [smem:[#allocation4 + %s201]]
  %s203 = scalar_lea.vmem %s2, %s202
  %v204 = vld [vmem:[%s203] sm:$0x1]
  %205 = vst.msk [vmem:[#allocation2 + $0xc] sm:$0x1] %vm35, %v204
  %s206 = sadd.s32 %s196, 2
  %s207 = sld [smem:[#allocation4 + %s206]]
  %s208 = scalar_lea.vmem %s2, %s207
  %v209 = vld [vmem:[%s208] sm:$0x1]
  %210 = vst.msk [vmem:[#allocation2 + $0x14] sm:$0x1] %vm35, %v209
  %s211 = sadd.s32 %s196, 3
  %s212 = sld [smem:[#allocation4 + %s211]]
  %s213 = scalar_lea.vmem %s2, %s212
  %v214 = vld [vmem:[%s213] sm:$0x1]
  %215 = vst.msk [vmem:[#allocation2 + $0x1c] sm:$0x1] %vm35, %v214
  %s216 = sadd.s32 %s196, 4
  %s217 = sld [smem:[#allocation4 + %s216]]
  %s218 = scalar_lea.vmem %s2, %s217
  %v219 = vld [vmem:[%s218] sm:$0x1]
  %220 = vst.msk [vmem:[#allocation2 + $0x24] sm:$0x1] %vm35, %v219
  %s221 = sadd.s32 %s196, 5
  %s222 = sld [smem:[#allocation4 + %s221]]
  %s223 = scalar_lea.vmem %s2, %s222
  %v224 = vld [vmem:[%s223] sm:$0x1]
  %225 = vst.msk [vmem:[#allocation2 + $0x2c] sm:$0x1] %vm35, %v224
  %s226 = sadd.s32 %s196, 6
  %s227 = sld [smem:[#allocation4 + %s226]]
  %s228 = scalar_lea.vmem %s2, %s227
  %v229 = vld [vmem:[%s228] sm:$0x1]
  %230 = vst.msk [vmem:[#allocation2 + $0x34] sm:$0x1] %vm35, %v229
  %s231 = sadd.s32 %s196, 7
  %s232 = sld [smem:[#allocation4 + %s231]]
  %s233 = scalar_lea.vmem %s2, %s232
  %v234 = vld [vmem:[%s233] sm:$0x1]
  %235 = vst.msk [vmem:[#allocation2 + $0x3c] sm:$0x1] %vm35, %v234
  %s236 = sadd.s32 %s30, 5
  %s237 = smul.u32 %s236, 8
  %s238 = sld [smem:[#allocation4 + %s237]]
  %s239 = scalar_lea.vmem %s2, %s238
  %v240 = vld [vmem:[%s239] sm:$0x1]
  %241 = vst.msk [vmem:[#allocation2 + $0x5] sm:$0x1] %vm35, %v240
  %s242 = sadd.s32 %s237, 1
  %s243 = sld [smem:[#allocation4 + %s242]]
  %s244 = scalar_lea.vmem %s2, %s243
  %v245 = vld [vmem:[%s244] sm:$0x1]
  %246 = vst.msk [vmem:[#allocation2 + $0xd] sm:$0x1] %vm35, %v245
  %s247 = sadd.s32 %s237, 2
  %s248 = sld [smem:[#allocation4 + %s247]]
  %s249 = scalar_lea.vmem %s2, %s248
  %v250 = vld [vmem:[%s249] sm:$0x1]
  %251 = vst.msk [vmem:[#allocation2 + $0x15] sm:$0x1] %vm35, %v250
  %s252 = sadd.s32 %s237, 3
  %s253 = sld [smem:[#allocation4 + %s252]]
  %s254 = scalar_lea.vmem %s2, %s253
  %v255 = vld [vmem:[%s254] sm:$0x1]
  %256 = vst.msk [vmem:[#allocation2 + $0x1d] sm:$0x1] %vm35, %v255
  %s257 = sadd.s32 %s237, 4
  %s258 = sld [smem:[#allocation4 + %s257]]
  %s259 = scalar_lea.vmem %s2, %s258
  %v260 = vld [vmem:[%s259] sm:$0x1]
  %261 = vst.msk [vmem:[#allocation2 + $0x25] sm:$0x1] %vm35, %v260
  %s262 = sadd.s32 %s237, 5
  %s263 = sld [smem:[#allocation4 + %s262]]
  %s264 = scalar_lea.vmem %s2, %s263
  %v265 = vld [vmem:[%s264] sm:$0x1]
  %266 = vst.msk [vmem:[#allocation2 + $0x2d] sm:$0x1] %vm35, %v265
  %s267 = sadd.s32 %s237, 6
  %s268 = sld [smem:[#allocation4 + %s267]]
  %s269 = scalar_lea.vmem %s2, %s268
  %v270 = vld [vmem:[%s269] sm:$0x1]
  %271 = vst.msk [vmem:[#allocation2 + $0x35] sm:$0x1] %vm35, %v270
  %s272 = sadd.s32 %s237, 7
  %s273 = sld [smem:[#allocation4 + %s272]]
  %s274 = scalar_lea.vmem %s2, %s273
  %v275 = vld [vmem:[%s274] sm:$0x1]
  %276 = vst.msk [vmem:[#allocation2 + $0x3d] sm:$0x1] %vm35, %v275
  %s277 = sadd.s32 %s30, 6
  %s278 = smul.u32 %s277, 8
  %s279 = sld [smem:[#allocation4 + %s278]]
  %s280 = scalar_lea.vmem %s2, %s279
  %v281 = vld [vmem:[%s280] sm:$0x1]
  %282 = vst.msk [vmem:[#allocation2 + $0x6] sm:$0x1] %vm35, %v281
  %s283 = sadd.s32 %s278, 1
  %s284 = sld [smem:[#allocation4 + %s283]]
  %s285 = scalar_lea.vmem %s2, %s284
  %v286 = vld [vmem:[%s285] sm:$0x1]
  %287 = vst.msk [vmem:[#allocation2 + $0xe] sm:$0x1] %vm35, %v286
  %s288 = sadd.s32 %s278, 2
  %s289 = sld [smem:[#allocation4 + %s288]]
  %s290 = scalar_lea.vmem %s2, %s289
  %v291 = vld [vmem:[%s290] sm:$0x1]
  %292 = vst.msk [vmem:[#allocation2 + $0x16] sm:$0x1] %vm35, %v291
  %s293 = sadd.s32 %s278, 3
  %s294 = sld [smem:[#allocation4 + %s293]]
  %s295 = scalar_lea.vmem %s2, %s294
  %v296 = vld [vmem:[%s295] sm:$0x1]
  %297 = vst.msk [vmem:[#allocation2 + $0x1e] sm:$0x1] %vm35, %v296
  %s298 = sadd.s32 %s278, 4
  %s299 = sld [smem:[#allocation4 + %s298]]
  %s300 = scalar_lea.vmem %s2, %s299
  %v301 = vld [vmem:[%s300] sm:$0x1]
  %302 = vst.msk [vmem:[#allocation2 + $0x26] sm:$0x1] %vm35, %v301
  %s303 = sadd.s32 %s278, 5
  %s304 = sld [smem:[#allocation4 + %s303]]
  %s305 = scalar_lea.vmem %s2, %s304
  %v306 = vld [vmem:[%s305] sm:$0x1]
  %307 = vst.msk [vmem:[#allocation2 + $0x2e] sm:$0x1] %vm35, %v306
  %s308 = sadd.s32 %s278, 6
  %s309 = sld [smem:[#allocation4 + %s308]]
  %s310 = scalar_lea.vmem %s2, %s309
  %v311 = vld [vmem:[%s310] sm:$0x1]
  %312 = vst.msk [vmem:[#allocation2 + $0x36] sm:$0x1] %vm35, %v311
  %s313 = sadd.s32 %s278, 7
  %s314 = sld [smem:[#allocation4 + %s313]]
  %s315 = scalar_lea.vmem %s2, %s314
  %v316 = vld [vmem:[%s315] sm:$0x1]
  %317 = vst.msk [vmem:[#allocation2 + $0x3e] sm:$0x1] %vm35, %v316
  %s318 = sadd.s32 %s30, 7
  %s319 = smul.u32 %s318, 8
  %s320 = sld [smem:[#allocation4 + %s319]]
  %s321 = scalar_lea.vmem %s2, %s320
  %v322 = vld [vmem:[%s321] sm:$0x1]
  %323 = vst.msk [vmem:[#allocation2 + $0x7] sm:$0x1] %vm35, %v322
  %s324 = sadd.s32 %s319, 1
  %s325 = sld [smem:[#allocation4 + %s324]]
  %s326 = scalar_lea.vmem %s2, %s325
  %v327 = vld [vmem:[%s326] sm:$0x1]
  %328 = vst.msk [vmem:[#allocation2 + $0xf] sm:$0x1] %vm35, %v327
  %s329 = sadd.s32 %s319, 2
  %s330 = sld [smem:[#allocation4 + %s329]]
  %s331 = scalar_lea.vmem %s2, %s330
  %v332 = vld [vmem:[%s331] sm:$0x1]
  %333 = vst.msk [vmem:[#allocation2 + $0x17] sm:$0x1] %vm35, %v332
  %s334 = sadd.s32 %s319, 3
  %s335 = sld [smem:[#allocation4 + %s334]]
  %s336 = scalar_lea.vmem %s2, %s335
  %v337 = vld [vmem:[%s336] sm:$0x1]
  %338 = vst.msk [vmem:[#allocation2 + $0x1f] sm:$0x1] %vm35, %v337
  %s339 = sadd.s32 %s319, 4
  %s340 = sld [smem:[#allocation4 + %s339]]
  %s341 = scalar_lea.vmem %s2, %s340
  %v342 = vld [vmem:[%s341] sm:$0x1]
  %343 = vst.msk [vmem:[#allocation2 + $0x27] sm:$0x1] %vm35, %v342
  %s344 = sadd.s32 %s319, 5
  %s345 = sld [smem:[#allocation4 + %s344]]
  %s346 = scalar_lea.vmem %s2, %s345
  %v347 = vld [vmem:[%s346] sm:$0x1]
  %348 = vst.msk [vmem:[#allocation2 + $0x2f] sm:$0x1] %vm35, %v347
  %s349 = sadd.s32 %s319, 6
  %s350 = sld [smem:[#allocation4 + %s349]]
  %s351 = scalar_lea.vmem %s2, %s350
  %v352 = vld [vmem:[%s351] sm:$0x1]
  %353 = vst.msk [vmem:[#allocation2 + $0x37] sm:$0x1] %vm35, %v352
  %s354 = sadd.s32 %s319, 7
  %s355 = sld [smem:[#allocation4 + %s354]]
  %s356 = scalar_lea.vmem %s2, %s355
  %v357 = vld [vmem:[%s356] sm:$0x1]
  %358 = vst.msk [vmem:[#allocation2 + $0x3f] sm:$0x1] %vm35, %v357
  %v359 = vld [vmem:[%s1] sm:$0xff]
  %vm360 = vcmp.ne.s32.totalorder %v359, 1933
  %v361 = vsel %vm360, 1, 0
  %v362 = vcvt.s32.f32 %v361
  %vm363 = vcmask 64512
  %v364 = vsel %vm363, %v362, 0.0
  %365 = vadd.xlane.f32.xlu0 %v364
  %v366 = vpop.xlane.xlu0 %365
  %v367 = vmax.f32 %v366, 1.0
  %v368 = vld [vmem:[#allocation2] sm:$0xff]
  %v369 = vld [vmem:[#allocation2 + $0x8] sm:$0xff]
  %v370 = vld [vmem:[#allocation2 + $0x10] sm:$0xff]
  %v371 = vld [vmem:[#allocation2 + $0x18] sm:$0xff]
  %v372 = vld [vmem:[#allocation2 + $0x20] sm:$0xff]
  %v373 = vld [vmem:[#allocation2 + $0x28] sm:$0xff]
  %v374 = vld [vmem:[#allocation2 + $0x30] sm:$0xff]
  %v375 = vld [vmem:[#allocation2 + $0x38] sm:$0xff]
  %377 = vset.pattern.permute.xlu0 0
  %378 = vperm.xlu0 %377, %v362
  %v379 = vpop.permute.xlu0 %378
  %v381 = vmul.f32 %v368, %v379
  %v382 = vadd.f32 %v381, 0.0
  %383 = vset.pattern.permute.xlu0 1
  %384 = vperm.xlu0 %383, %v362
  %v385 = vpop.permute.xlu0 %384
  %v387 = vmul.f32 %v369, %v385
  %v388 = vadd.f32 %v382, %v387
  %389 = vset.pattern.permute.xlu0 2
  %390 = vperm.xlu0 %389, %v362
  %v391 = vpop.permute.xlu0 %390
  %v393 = vmul.f32 %v370, %v391
  %v394 = vadd.f32 %v388, %v393
  %395 = vset.pattern.permute.xlu0 3
  %396 = vperm.xlu0 %395, %v362
  %v397 = vpop.permute.xlu0 %396
  %v399 = vmul.f32 %v371, %v397
  %v400 = vadd.f32 %v394, %v399
  %401 = vset.pattern.permute.xlu0 4
  %402 = vperm.xlu0 %401, %v362
  %v403 = vpop.permute.xlu0 %402
  %v405 = vmul.f32 %v372, %v403
  %v406 = vadd.f32 %v400, %v405
  %407 = vset.pattern.permute.xlu0 5
  %408 = vperm.xlu0 %407, %v362
  %v409 = vpop.permute.xlu0 %408
  %v411 = vmul.f32 %v373, %v409
  %v412 = vadd.f32 %v406, %v411
  %413 = vset.pattern.permute.xlu0 6
  %414 = vperm.xlu0 %413, %v362
  %v415 = vpop.permute.xlu0 %414
  %v417 = vmul.f32 %v374, %v415
  %v418 = vadd.f32 %v412, %v417
  %419 = vset.pattern.permute.xlu0 7
  %420 = vperm.xlu0 %419, %v362
  %v421 = vpop.permute.xlu0 %420
  %v423 = vmul.f32 %v375, %v421
  %v424 = vadd.f32 %v418, %v423
  %v425 = vrcp.pop %v367
  %v426 = vmul.f32 %v424, %v425
  %v427 = vld [vmem:[%s3] sm:$0xff]
  %v428 = vld [vmem:[%s3 + $0x8] sm:$0xff]
  %v429 = vld [vmem:[%s3 + $0x10] sm:$0xff]
  %v430 = vld [vmem:[%s3 + $0x18] sm:$0xff]
  %v431 = vld [vmem:[%s4] sm:$0x1]
  %v433 = vlaneseq
  %v434 = vshrl.u32 %v433, 7
  %v435 = vsub.s32 0, %v434
  %v436 = vrot.slane %v431, %v435
  %vm438 = vcmask 261120
  %v440 = vsel %vm438, %v426, 0
  %442 = vmatprep.subr.mxu0 0.0
  %443 = vmatpush1.msra.mxu0 0.0
  %444 = vmatprep.subr.mxu0 0.0
  %445 = vmatpush1.msra.mxu0 0.0
  %446 = vmatprep.subr.mxu0 0.0
  %447 = vmatpush1.msra.mxu0 0.0
  %448 = vmatprep.subr.mxu0 0.0
  %449 = vmatpush1.msra.mxu0 0.0
  %450 = vmatprep.subr.mxu0 0.0
  %451 = vmatpush1.msra.mxu0 0.0
  %452 = vmatprep.subr.mxu0 0.0
  %453 = vmatpush1.msra.mxu0 0.0
  %454 = vmatprep.subr.mxu0 0.0
  %455 = vmatpush1.msra.mxu0 0.0
  %456 = vmatprep.subr.mxu0 0.0
  %457 = vmatpush1.msra.mxu0 0.0
  %458 = vmatprep.subr.mxu0 0.0
  %459 = vmatpush1.msra.mxu0 0.0
  %460 = vmatprep.subr.mxu0 0.0
  %461 = vmatpush1.msra.mxu0 0.0
  %462 = vmatprep.subr.mxu0 0.0
  %463 = vmatpush1.msra.mxu0 0.0
  %464 = vmatprep.subr.mxu0 0.0
  %465 = vmatpush1.msra.mxu0 0.0
  %466 = vmatprep.subr.mxu0 0.0
  %467 = vmatpush1.msra.mxu0 %v430
  %468 = vmatprep.subr.mxu0 0.0
  %469 = vmatpush1.msra.mxu0 %v429
  %470 = vmatprep.subr.mxu0 0.0
  %471 = vmatpush1.msra.mxu0 %v428
  %472 = vmatprep.subr.mxu0 0.0
  %473 = vmatpush1.msra.mxu0 %v427
  %474 = vmatprep.subr.mxu0 0.0
  %475 = vmatpush2.msra.mxu0 0.0
  %476 = vmatprep.subr.mxu0 0.0
  %477 = vmatpush2.msra.mxu0 0.0
  %478 = vmatprep.subr.mxu0 0.0
  %479 = vmatpush2.msra.mxu0 0.0
  %480 = vmatprep.subr.mxu0 0.0
  %481 = vmatpush2.msra.mxu0 0.0
  %482 = vmatprep.subr.mxu0 0.0
  %483 = vmatpush2.msra.mxu0 0.0
  %484 = vmatprep.subr.mxu0 0.0
  %485 = vmatpush2.msra.mxu0 0.0
  %486 = vmatprep.subr.mxu0 0.0
  %487 = vmatpush2.msra.mxu0 0.0
  %488 = vmatprep.subr.mxu0 0.0
  %489 = vmatpush2.msra.mxu0 0.0
  %490 = vmatprep.subr.mxu0 0.0
  %491 = vmatpush2.msra.mxu0 0.0
  %492 = vmatprep.subr.mxu0 0.0
  %493 = vmatpush2.msra.mxu0 0.0
  %494 = vmatprep.subr.mxu0 0.0
  %495 = vmatpush2.msra.mxu0 0.0
  %496 = vmatprep.subr.mxu0 0.0
  %497 = vmatpush2.msra.mxu0 0.0
  %498 = vmatprep.subr.mxu0 0.0
  %499 = vmatpush2.msra.mxu0 0.0
  %500 = vmatprep.subr.mxu0 0.0
  %501 = vmatpush2.msra.mxu0 0.0
  %502 = vmatprep.subr.mxu0 0.0
  %503 = vmatpush2.msra.mxu0 0.0
  %504 = vmatprep.subr.mxu0 0.0
  %505 = vmatpush2.msra.mxu0 0.0
  %506 = vmatprep.mubr.f32.mxu0 0.0
  %507 = vmatmul.mubr.f32.gmra.mxu0 %v440
  %v508 = vpop.f32.mrf.mxu0
  %v509 = vadd.f32 %v436, %v508
  %v510 = vpop.f32.mrf.mxu0
  %511 = vdwg.mxu0
  %v512 = vmax.f32 %v509, 0.0
  %v513 = vld [vmem:[%s5] sm:$0xff]
  %v514 = vld [vmem:[%s5 + $0x8] sm:$0xff]
  %v515 = vld [vmem:[%s5 + $0x10] sm:$0xff]
  %v516 = vld [vmem:[%s5 + $0x18] sm:$0xff]
  %v517 = vld [vmem:[%s5 + $0x20] sm:$0xff]
  %v518 = vld [vmem:[%s5 + $0x28] sm:$0xff]
  %v519 = vld [vmem:[%s5 + $0x30] sm:$0xff]
  %v520 = vld [vmem:[%s5 + $0x38] sm:$0xff]
  %v521 = vld [vmem:[%s5 + $0x40] sm:$0xff]
  %v522 = vld [vmem:[%s5 + $0x48] sm:$0xff]
  %v523 = vld [vmem:[%s5 + $0x50] sm:$0xff]
  %v524 = vld [vmem:[%s5 + $0x58] sm:$0xff]
  %v525 = vld [vmem:[%s5 + $0x60] sm:$0xff]
  %v526 = vld [vmem:[%s5 + $0x68] sm:$0xff]
  %v527 = vld [vmem:[%s5 + $0x70] sm:$0xff]
  %v528 = vld [vmem:[%s5 + $0x78] sm:$0xff]
  %v529 = vld [vmem:[%s6] sm:$0x1]
  %v531 = vlaneseq
  %v532 = vshrl.u32 %v531, 7
  %v533 = vsub.s32 0, %v532
  %v534 = vrot.slane %v529, %v533
  %536 = vmatprep.subr.mxu0 0.0
  %537 = vmatpush1.msra.mxu0 %v528
  %538 = vmatprep.subr.mxu0 0.0
  %539 = vmatpush1.msra.mxu0 %v527
  %540 = vmatprep.subr.mxu0 0.0
  %541 = vmatpush1.msra.mxu0 %v526
  %542 = vmatprep.subr.mxu0 0.0
  %543 = vmatpush1.msra.mxu0 %v525
  %544 = vmatprep.subr.mxu0 0.0
  %545 = vmatpush1.msra.mxu0 %v524
  %546 = vmatprep.subr.mxu0 0.0
  %547 = vmatpush1.msra.mxu0 %v523
  %548 = vmatprep.subr.mxu0 0.0
  %549 = vmatpush1.msra.mxu0 %v522
  %550 = vmatprep.subr.mxu0 0.0
  %551 = vmatpush1.msra.mxu0 %v521
  %552 = vmatprep.subr.mxu0 0.0
  %553 = vmatpush1.msra.mxu0 %v520
  %554 = vmatprep.subr.mxu0 0.0
  %555 = vmatpush1.msra.mxu0 %v519
  %556 = vmatprep.subr.mxu0 0.0
  %557 = vmatpush1.msra.mxu0 %v518
  %558 = vmatprep.subr.mxu0 0.0
  %559 = vmatpush1.msra.mxu0 %v517
  %560 = vmatprep.subr.mxu0 0.0
  %561 = vmatpush1.msra.mxu0 %v516
  %562 = vmatprep.subr.mxu0 0.0
  %563 = vmatpush1.msra.mxu0 %v515
  %564 = vmatprep.subr.mxu0 0.0
  %565 = vmatpush1.msra.mxu0 %v514
  %566 = vmatprep.subr.mxu0 0.0
  %567 = vmatpush1.msra.mxu0 %v513
  %568 = vmatprep.subr.mxu0 0.0
  %569 = vmatpush2.msra.mxu0 0.0
  %570 = vmatprep.subr.mxu0 0.0
  %571 = vmatpush2.msra.mxu0 0.0
  %572 = vmatprep.subr.mxu0 0.0
  %573 = vmatpush2.msra.mxu0 0.0
  %574 = vmatprep.subr.mxu0 0.0
  %575 = vmatpush2.msra.mxu0 0.0
  %576 = vmatprep.subr.mxu0 0.0
  %577 = vmatpush2.msra.mxu0 0.0
  %578 = vmatprep.subr.mxu0 0.0
  %579 = vmatpush2.msra.mxu0 0.0
  %580 = vmatprep.subr.mxu0 0.0
  %581 = vmatpush2.msra.mxu0 0.0
  %582 = vmatprep.subr.mxu0 0.0
  %583 = vmatpush2.msra.mxu0 0.0
  %584 = vmatprep.subr.mxu0 0.0
  %585 = vmatpush2.msra.mxu0 0.0
  %586 = vmatprep.subr.mxu0 0.0
  %587 = vmatpush2.msra.mxu0 0.0
  %588 = vmatprep.subr.mxu0 0.0
  %589 = vmatpush2.msra.mxu0 0.0
  %590 = vmatprep.subr.mxu0 0.0
  %591 = vmatpush2.msra.mxu0 0.0
  %592 = vmatprep.subr.mxu0 0.0
  %593 = vmatpush2.msra.mxu0 0.0
  %594 = vmatprep.subr.mxu0 0.0
  %595 = vmatpush2.msra.mxu0 0.0
  %596 = vmatprep.subr.mxu0 0.0
  %597 = vmatpush2.msra.mxu0 0.0
  %598 = vmatprep.subr.mxu0 0.0
  %599 = vmatpush2.msra.mxu0 0.0
  %600 = vmatprep.mubr.f32.mxu0 0.0
  %601 = vmatmul.mubr.f32.gmra.mxu0 %v512
  %v602 = vpop.f32.mrf.mxu0
  %v603 = vadd.f32 %v534, %v602
  %v604 = vpop.f32.mrf.mxu0
  %605 = vdwg.mxu0
  %606 = vst [vmem:[%s7] sm:$0xff] %v603
  // Predicated region
  $region26: #{ff_network_forward.1} parent=0 // pred_check
    _
  $region27: #{ff_network_forward.1} parent=0 // pred_check_branch
    %608 = sbr.rel (0) target = $region29
  $region28: #{ff_network_forward.1} parent=0 // pred_region
    _
  $region29: #{ff_network_forward.1} parent=0 // pred_fallthru
    _
  // Predicated region
  $region30: #{ff_network_forward.1} parent=0 // pred_check
    _
  $region31: #{ff_network_forward.1} parent=0 // pred_check_branch
    %610 = sbr.rel (0) target = $region33
  $region32: #{ff_network_forward.1} parent=0 // pred_region
    _
  $region33: #{ff_network_forward.1} parent=0 // pred_fallthru
    _

</llo_original>
